<compile_context>
chip_gen: v7x
topology: tpu7x:2x2x1
jax: 0.10.0
libtpu: 0.0.40
codegen_flags: <defaults>
</compile_context>

<pallas_src>
import jax
import jax.numpy as jnp
from jax.experimental import pallas as pl
from jax.experimental.pallas import tpu as pltpu


_VMEM_SPEC = pl.BlockSpec(memory_space=pltpu.MemorySpace.VMEM)


# ----------------------------------------------------------------------------
# Fused decoder kernel factory (static shapes baked in)
# ----------------------------------------------------------------------------
def _make_decoder_kernel(layer_num, T, B, F, H, O):
    """Build the fused (L-layer LSTM + Linear) kernel for static shapes.

    Ref order: x2d, h0, c0, [wih_l, whh_l, b_l]*L, w_out, b_out,
               y_out, h_n, c_n, hbuf(scratch).
    x2d is TIME-MAJOR flattened: row index = t*B + b.
    """

    def kernel(*refs):
        x_ref = refs[0]                       # (T*B, F)  f32
        h0_ref = refs[1]                      # (L, B, H) f32
        c0_ref = refs[2]                      # (L, B, H) f32
        w_refs = refs[3:3 + 3 * layer_num]    # wih (Din,4H) bf16, whh (H,4H) bf16, b (1,4H) f32
        wout_ref = refs[3 + 3 * layer_num]    # (H, O) bf16
        bout_ref = refs[4 + 3 * layer_num]    # (1, O) f32
        y_ref = refs[5 + 3 * layer_num]       # (T*B, O) f32  out
        hn_ref = refs[6 + 3 * layer_num]      # (L, B, H) f32 out
        cn_ref = refs[7 + 3 * layer_num]      # (L, B, H) f32 out
        hbuf = refs[8 + 3 * layer_num]        # (T*B, H) f32  scratch (layer outputs)

        x_in = x_ref[...]                     # current layer's input sequence
        for l in range(layer_num):
            wih = w_refs[3 * l][...]          # bf16
            whh = w_refs[3 * l + 1][...]      # bf16
            b = w_refs[3 * l + 2][...]        # f32 (1, 4H)

            # Hoisted input projection: ONE big MXU matmul for all T steps,
            # bias folded in (no per-step broadcast/add inside the recurrence).
            gx = jnp.dot(x_in.astype(jnp.bfloat16), wih,
                         preferred_element_type=jnp.float32) + b   # (T*B, 4H)

            h = h0_ref[l]                     # (B, H) f32
            c = c0_ref[l]                     # (B, H) f32
            # Fully unrolled time loop (T static & small): static slices only,
            # the sole serial dependence is the tiny h @ W_hh matmul.
            for t in range(T):
                gates = gx[t * B:(t + 1) * B, :] + jnp.dot(
                    h.astype(jnp.bfloat16), whh,
                    preferred_element_type=jnp.float32)            # (B, 4H)
                # PyTorch gate order: i, f, g, o.  Gate math kept in f32.
                i_g = jax.nn.sigmoid(gates[:, 0:H])
                f_g = jax.nn.sigmoid(gates[:, H:2 * H])
                g_g = jnp.tanh(gates[:, 2 * H:3 * H])
                o_g = jax.nn.sigmoid(gates[:, 3 * H:4 * H])
                c = f_g * c + i_g * g_g
                h = o_g * jnp.tanh(c)
                hbuf[t * B:(t + 1) * B, :] = h
            hn_ref[l] = h
            cn_ref[l] = c
            x_in = hbuf[...]                  # next layer input, stays in VMEM

        # Fused dense tail: one (T*B, H) @ (H, O) matmul + bias, no HBM trip
        # for the last LSTM layer's activations.
        y_ref[...] = jnp.dot(x_in.astype(jnp.bfloat16), wout_ref[...],
                             preferred_element_type=jnp.float32) + bout_ref[...]

    return kernel


# ----------------------------------------------------------------------------
# Decoder module (parameter container + forward)
# ----------------------------------------------------------------------------
class Decoder:
    def __init__(self, feature_size, hidden_size, layer_num, output_size,
                 key=None):
        self.feature_size = feature_size
        self.hidden_size = hidden_size
        self.layer_num = layer_num
        self.output_size = output_size

        if key is None:
            key = jax.random.PRNGKey(0)
        k_lstm = 1.0 / jnp.sqrt(hidden_size)

        # Matmul weights stored bf16 (MXU operands); biases stay f32.
        self.lstm_params = []
        for layer in range(layer_num):
            d_in = feature_size if layer == 0 else hidden_size
            key, k1, k2, k3, k4 = jax.random.split(key, 5)
            w_ih = jax.random.uniform(k1, (4 * hidden_size, d_in),
                                      minval=-k_lstm, maxval=k_lstm,
                                      dtype=jnp.float32)
            w_hh = jax.random.uniform(k2, (4 * hidden_size, hidden_size),
                                      minval=-k_lstm, maxval=k_lstm,
                                      dtype=jnp.float32)
            b_ih = jax.random.uniform(k3, (4 * hidden_size,),
                                      minval=-k_lstm, maxval=k_lstm,
                                      dtype=jnp.float32)
            b_hh = jax.random.uniform(k4, (4 * hidden_size,),
                                      minval=-k_lstm, maxval=k_lstm,
                                      dtype=jnp.float32)
            self.lstm_params.append(
                (w_ih.T.astype(jnp.bfloat16),
                 w_hh.T.astype(jnp.bfloat16),
                 (b_ih + b_hh)[None, :]))

        k_lin = 1.0 / jnp.sqrt(hidden_size)
        key, k5, k6 = jax.random.split(key, 3)
        w_dense = jax.random.uniform(k5, (output_size, hidden_size),
                                     minval=-k_lin, maxval=k_lin,
                                     dtype=jnp.float32)
        b_dense = jax.random.uniform(k6, (output_size,),
                                     minval=-k_lin, maxval=k_lin,
                                     dtype=jnp.float32)
        self.w_dense_t = w_dense.T.astype(jnp.bfloat16)
        self.b_dense = b_dense[None, :]

    def __call__(self, inp, hidden):
        """inp: (B, T, feature_size); hidden: (h0, c0), each (L, B, H)."""
        h0, c0 = hidden
        B, T, F = inp.shape
        H, O, L = self.hidden_size, self.output_size, self.layer_num

        # Time-major flattening (row = t*B + b); tiny XLA transpose/reshape.
        x2d = jnp.transpose(inp, (1, 0, 2)).reshape(T * B, F)

        args = [x2d, h0, c0]
        for (wih_t, whh_t, b) in self.lstm_params:
            args += [wih_t, whh_t, b]
        args += [self.w_dense_t, self.b_dense]

        # Advisory cost estimate for the XLA scheduler.
        flops, trans, w_bytes = 0, 0, 0
        d_in = F
        for _ in range(L):
            flops += 2 * T * B * 4 * H * (d_in + H)
            trans += 5 * T * B * H
            w_bytes += 2 * (d_in + H) * 4 * H + 4 * 4 * H
            d_in = H
        flops += 2 * T * B * H * O
        w_bytes += 2 * H * O + 4 * O
        bytes_accessed = 4 * (T * B * F + 4 * L * B * H + T * B * O) + w_bytes

        kernel = _make_decoder_kernel(L, T, B, F, H, O)
        y2d, h_n, c_n = pl.pallas_call(
            kernel,
            out_shape=(
                jax.ShapeDtypeStruct((T * B, O), jnp.float32),
                jax.ShapeDtypeStruct((L, B, H), jnp.float32),
                jax.ShapeDtypeStruct((L, B, H), jnp.float32),
            ),
            in_specs=[_VMEM_SPEC] * len(args),
            out_specs=(_VMEM_SPEC, _VMEM_SPEC, _VMEM_SPEC),
            scratch_shapes=[pltpu.VMEM((T * B, H), jnp.float32)],
            compiler_params=pltpu.CompilerParams(
                vmem_limit_bytes=32 * 1024 * 1024),
            cost_estimate=pl.CostEstimate(
                flops=int(flops), transcendentals=int(trans),
                bytes_accessed=int(bytes_accessed)),
        )(*args)

        y = y2d.reshape(T, B, O).transpose(1, 0, 2)     # (B, T, O)
        return y, (h_n, c_n)


# ----------------------------------------------------------------------------
# Pure-JAX reference (same math / same bf16 matmul casts) for correctness
# ----------------------------------------------------------------------------
def reference_forward(dec, inp, hidden):
    h0, c0 = hidden
    x = inp  # (B, T, F)
    H = dec.hidden_size
    hn_list, cn_list = [], []
    for layer in range(dec.layer_num):
        wih_t, whh_t, b = dec.lstm_params[layer]
        h, c = h0[layer], c0[layer]
        outs = []
        for t in range(x.shape[1]):
            gates = (jnp.dot(x[:, t, :].astype(jnp.bfloat16), wih_t,
                             preferred_element_type=jnp.float32)
                     + jnp.dot(h.astype(jnp.bfloat16), whh_t,
                               preferred_element_type=jnp.float32)
                     + b)
            i_g = jax.nn.sigmoid(gates[:, 0:H])
            f_g = jax.nn.sigmoid(gates[:, H:2 * H])
            g_g = jnp.tanh(gates[:, 2 * H:3 * H])
            o_g = jax.nn.sigmoid(gates[:, 3 * H:4 * H])
            c = f_g * c + i_g * g_g
            h = o_g * jnp.tanh(c)
            outs.append(h)
        x = jnp.stack(outs, axis=1)
        hn_list.append(h)
        cn_list.append(c)
    Bsz, T = x.shape[0], x.shape[1]
    y = (jnp.dot(x.reshape(Bsz * T, H).astype(jnp.bfloat16), dec.w_dense_t,
                 preferred_element_type=jnp.float32) + dec.b_dense)
    y = y.reshape(Bsz, T, dec.output_size)
    return y, (jnp.stack(hn_list), jnp.stack(cn_list))


# ----------------------------------------------------------------------------
if __name__ == "__main__":
    B, T = 2, 8
    FEATURE, HIDDEN, LAYERS, OUT = 16, 32, 2, 8

    key = jax.random.PRNGKey(0)
    k_in, k_h, k_c, k_params = jax.random.split(key, 4)
    x = jax.random.normal(k_in, (B, T, FEATURE), dtype=jnp.float32)
    h0 = jax.random.normal(k_h, (LAYERS, B, HIDDEN), dtype=jnp.float32)
    c0 = jax.random.normal(k_c, (LAYERS, B, HIDDEN), dtype=jnp.float32)

    dec = Decoder(FEATURE, HIDDEN, LAYERS, OUT, key=k_params)

    y, (h_n, c_n) = dec(x, (h0, c0))
    jax.block_until_ready((y, h_n, c_n))

    # sanity check against pure-JAX reference (same bf16 matmul casts)
    y_ref, (h_ref, c_ref) = reference_forward(dec, x, (h0, c0))
    assert y.shape == (B, T, OUT)
    assert h_n.shape == (LAYERS, B, HIDDEN) and c_n.shape == (LAYERS, B, HIDDEN)
    assert jnp.allclose(y, y_ref, atol=2e-3, rtol=2e-3), "output mismatch"
    assert jnp.allclose(h_n, h_ref, atol=2e-3, rtol=2e-3), "h_n mismatch"
    assert jnp.allclose(c_n, c_ref, atol=2e-3, rtol=2e-3), "c_n mismatch"

    print("KERNEL_OK")
</pallas_src>

<mosaic_0001>
module attributes {stable_mosaic.version = 11 : i64} {
  func.func @kernel(%arg0: memref<16x16xf32, #tpu.memory_space<vmem>>, %arg1: memref<2x2x32xf32, #tpu.memory_space<vmem>>, %arg2: memref<2x2x32xf32, #tpu.memory_space<vmem>>, %arg3: memref<16x128xbf16, #tpu.memory_space<vmem>>, %arg4: memref<32x128xbf16, #tpu.memory_space<vmem>>, %arg5: memref<1x128xf32, #tpu.memory_space<vmem>>, %arg6: memref<32x128xbf16, #tpu.memory_space<vmem>>, %arg7: memref<32x128xbf16, #tpu.memory_space<vmem>>, %arg8: memref<1x128xf32, #tpu.memory_space<vmem>>, %arg9: memref<32x8xbf16, #tpu.memory_space<vmem>>, %arg10: memref<1x8xf32, #tpu.memory_space<vmem>>, %arg11: memref<16x8xf32, #tpu.memory_space<vmem>>, %arg12: memref<2x2x32xf32, #tpu.memory_space<vmem>>, %arg13: memref<2x2x32xf32, #tpu.memory_space<vmem>>, %arg14: memref<16x32xf32, #tpu.memory_space<vmem>>) attributes {dimension_semantics = [], scalar_prefetch = 0 : i64, scratch_operands = 1 : i64, tpu.core_type = #tpu.core_type<tc>} {
    %c0 = arith.constant 0 : index
    %c0_0 = arith.constant 0 : index
    %0 = vector.load %arg0[%c0, %c0_0] : memref<16x16xf32, #tpu.memory_space<vmem>>, vector<16x16xf32>
    %c0_1 = arith.constant 0 : index
    %c0_2 = arith.constant 0 : index
    %1 = vector.load %arg3[%c0_1, %c0_2] : memref<16x128xbf16, #tpu.memory_space<vmem>>, vector<16x128xbf16>
    %c0_3 = arith.constant 0 : index
    %c0_4 = arith.constant 0 : index
    %2 = vector.load %arg4[%c0_3, %c0_4] : memref<32x128xbf16, #tpu.memory_space<vmem>>, vector<32x128xbf16>
    %c0_5 = arith.constant 0 : index
    %c0_6 = arith.constant 0 : index
    %3 = vector.load %arg5[%c0_5, %c0_6] : memref<1x128xf32, #tpu.memory_space<vmem>>, vector<1x128xf32>
    %4 = arith.truncf %0 : vector<16x16xf32> to vector<16x16xbf16>
    %cst = arith.constant dense<0.000000e+00> : vector<16x128xf32>
    %5 = tpu.matmul %4, %1, %cst {dimension_numbers = #tpu.dot_dimension_numbers<[1], [0], [0], [1], [0, 0, 1, 1], [], []>} : vector<16x16xbf16>, vector<16x128xbf16>, vector<16x128xf32> -> vector<16x128xf32>
    %6 = vector.broadcast %3 : vector<1x128xf32> to vector<16x128xf32>
    %7 = arith.addf %5, %6 : vector<16x128xf32>
    %c0_7 = arith.constant 0 : index
    %c0_8 = arith.constant 0 : index
    %c0_9 = arith.constant 0 : index
    %8 = vector.load %arg1[%c0_7, %c0_8, %c0_9] : memref<2x2x32xf32, #tpu.memory_space<vmem>>, vector<1x2x32xf32>
    %9 = vector.shape_cast %8 : vector<1x2x32xf32> to vector<2x32xf32>
    %c0_10 = arith.constant 0 : index
    %c0_11 = arith.constant 0 : index
    %c0_12 = arith.constant 0 : index
    %10 = vector.load %arg2[%c0_10, %c0_11, %c0_12] : memref<2x2x32xf32, #tpu.memory_space<vmem>>, vector<1x2x32xf32>
    %11 = vector.shape_cast %10 : vector<1x2x32xf32> to vector<2x32xf32>
    %12 = vector.extract_strided_slice %7 {offsets = [0, 0], sizes = [2, 128], strides = [1, 1]} : vector<16x128xf32> to vector<2x128xf32>
    %13 = arith.truncf %9 : vector<2x32xf32> to vector<2x32xbf16>
    %cst_13 = arith.constant dense<0.000000e+00> : vector<2x128xf32>
    %14 = tpu.matmul %13, %2, %cst_13 {dimension_numbers = #tpu.dot_dimension_numbers<[1], [0], [0], [1], [0, 0, 1, 1], [], []>} : vector<2x32xbf16>, vector<32x128xbf16>, vector<2x128xf32> -> vector<2x128xf32>
    %15 = arith.addf %12, %14 : vector<2x128xf32>
    %16 = vector.extract_strided_slice %15 {offsets = [0, 0], sizes = [2, 32], strides = [1, 1]} : vector<2x128xf32> to vector<2x32xf32>
    %17 = arith.negf %16 : vector<2x32xf32>
    %18 = math.exp %17 : vector<2x32xf32>
    %cst_14 = arith.constant 1.000000e+00 : f32
    %19 = vector.broadcast %cst_14 : f32 to vector<2x32xf32>
    %20 = arith.addf %19, %18 : vector<2x32xf32>
    %21 = arith.divf %19, %20 : vector<2x32xf32>
    %22 = vector.extract_strided_slice %15 {offsets = [0, 32], sizes = [2, 32], strides = [1, 1]} : vector<2x128xf32> to vector<2x32xf32>
    %23 = arith.negf %22 : vector<2x32xf32>
    %24 = math.exp %23 : vector<2x32xf32>
    %cst_15 = arith.constant 1.000000e+00 : f32
    %25 = vector.broadcast %cst_15 : f32 to vector<2x32xf32>
    %26 = arith.addf %25, %24 : vector<2x32xf32>
    %27 = arith.divf %25, %26 : vector<2x32xf32>
    %28 = vector.extract_strided_slice %15 {offsets = [0, 64], sizes = [2, 32], strides = [1, 1]} : vector<2x128xf32> to vector<2x32xf32>
    %29 = math.tanh %28 : vector<2x32xf32>
    %30 = vector.extract_strided_slice %15 {offsets = [0, 96], sizes = [2, 32], strides = [1, 1]} : vector<2x128xf32> to vector<2x32xf32>
    %31 = arith.negf %30 : vector<2x32xf32>
    %32 = math.exp %31 : vector<2x32xf32>
    %cst_16 = arith.constant 1.000000e+00 : f32
    %33 = vector.broadcast %cst_16 : f32 to vector<2x32xf32>
    %34 = arith.addf %33, %32 : vector<2x32xf32>
    %35 = arith.divf %33, %34 : vector<2x32xf32>
    %36 = arith.mulf %27, %11 : vector<2x32xf32>
    %37 = arith.mulf %21, %29 : vector<2x32xf32>
    %38 = arith.addf %36, %37 : vector<2x32xf32>
    %39 = math.tanh %38 : vector<2x32xf32>
    %40 = arith.mulf %35, %39 : vector<2x32xf32>
    %c0_17 = arith.constant 0 : index
    %c0_18 = arith.constant 0 : index
    %41 = vector.load %arg14[%c0_17, %c0_18] : memref<16x32xf32, #tpu.memory_space<vmem>>, vector<2x32xf32>
    tpu.vector_store %arg14[%c0_17, %c0_18], %40 {strides = array<i32>} : memref<16x32xf32, #tpu.memory_space<vmem>>, vector<2x32xf32>,
    %42 = vector.extract_strided_slice %7 {offsets = [2, 0], sizes = [2, 128], strides = [1, 1]} : vector<16x128xf32> to vector<2x128xf32>
    %43 = arith.truncf %40 : vector<2x32xf32> to vector<2x32xbf16>
    %cst_19 = arith.constant dense<0.000000e+00> : vector<2x128xf32>
    %44 = tpu.matmul %43, %2, %cst_19 {dimension_numbers = #tpu.dot_dimension_numbers<[1], [0], [0], [1], [0, 0, 1, 1], [], []>} : vector<2x32xbf16>, vector<32x128xbf16>, vector<2x128xf32> -> vector<2x128xf32>
    %45 = arith.addf %42, %44 : vector<2x128xf32>
    %46 = vector.extract_strided_slice %45 {offsets = [0, 0], sizes = [2, 32], strides = [1, 1]} : vector<2x128xf32> to vector<2x32xf32>
    %47 = arith.negf %46 : vector<2x32xf32>
    %48 = math.exp %47 : vector<2x32xf32>
    %cst_20 = arith.constant 1.000000e+00 : f32
    %49 = vector.broadcast %cst_20 : f32 to vector<2x32xf32>
    %50 = arith.addf %49, %48 : vector<2x32xf32>
    %51 = arith.divf %49, %50 : vector<2x32xf32>
    %52 = vector.extract_strided_slice %45 {offsets = [0, 32], sizes = [2, 32], strides = [1, 1]} : vector<2x128xf32> to vector<2x32xf32>
    %53 = arith.negf %52 : vector<2x32xf32>
    %54 = math.exp %53 : vector<2x32xf32>
    %cst_21 = arith.constant 1.000000e+00 : f32
    %55 = vector.broadcast %cst_21 : f32 to vector<2x32xf32>
    %56 = arith.addf %55, %54 : vector<2x32xf32>
    %57 = arith.divf %55, %56 : vector<2x32xf32>
    %58 = vector.extract_strided_slice %45 {offsets = [0, 64], sizes = [2, 32], strides = [1, 1]} : vector<2x128xf32> to vector<2x32xf32>
    %59 = math.tanh %58 : vector<2x32xf32>
    %60 = vector.extract_strided_slice %45 {offsets = [0, 96], sizes = [2, 32], strides = [1, 1]} : vector<2x128xf32> to vector<2x32xf32>
    %61 = arith.negf %60 : vector<2x32xf32>
    %62 = math.exp %61 : vector<2x32xf32>
    %cst_22 = arith.constant 1.000000e+00 : f32
    %63 = vector.broadcast %cst_22 : f32 to vector<2x32xf32>
    %64 = arith.addf %63, %62 : vector<2x32xf32>
    %65 = arith.divf %63, %64 : vector<2x32xf32>
    %66 = arith.mulf %57, %38 : vector<2x32xf32>
    %67 = arith.mulf %51, %59 : vector<2x32xf32>
    %68 = arith.addf %66, %67 : vector<2x32xf32>
    %69 = math.tanh %68 : vector<2x32xf32>
    %70 = arith.mulf %65, %69 : vector<2x32xf32>
    %c2 = arith.constant 2 : index
    %c0_23 = arith.constant 0 : index
    %71 = vector.load %arg14[%c2, %c0_23] : memref<16x32xf32, #tpu.memory_space<vmem>>, vector<2x32xf32>
    tpu.vector_store %arg14[%c2, %c0_23], %70 {strides = array<i32>} : memref<16x32xf32, #tpu.memory_space<vmem>>, vector<2x32xf32>,
    %72 = vector.extract_strided_slice %7 {offsets = [4, 0], sizes = [2, 128], strides = [1, 1]} : vector<16x128xf32> to vector<2x128xf32>
    %73 = arith.truncf %70 : vector<2x32xf32> to vector<2x32xbf16>
    %cst_24 = arith.constant dense<0.000000e+00> : vector<2x128xf32>
    %74 = tpu.matmul %73, %2, %cst_24 {dimension_numbers = #tpu.dot_dimension_numbers<[1], [0], [0], [1], [0, 0, 1, 1], [], []>} : vector<2x32xbf16>, vector<32x128xbf16>, vector<2x128xf32> -> vector<2x128xf32>
    %75 = arith.addf %72, %74 : vector<2x128xf32>
    %76 = vector.extract_strided_slice %75 {offsets = [0, 0], sizes = [2, 32], strides = [1, 1]} : vector<2x128xf32> to vector<2x32xf32>
    %77 = arith.negf %76 : vector<2x32xf32>
    %78 = math.exp %77 : vector<2x32xf32>
    %cst_25 = arith.constant 1.000000e+00 : f32
    %79 = vector.broadcast %cst_25 : f32 to vector<2x32xf32>
    %80 = arith.addf %79, %78 : vector<2x32xf32>
    %81 = arith.divf %79, %80 : vector<2x32xf32>
    %82 = vector.extract_strided_slice %75 {offsets = [0, 32], sizes = [2, 32], strides = [1, 1]} : vector<2x128xf32> to vector<2x32xf32>
    %83 = arith.negf %82 : vector<2x32xf32>
    %84 = math.exp %83 : vector<2x32xf32>
    %cst_26 = arith.constant 1.000000e+00 : f32
    %85 = vector.broadcast %cst_26 : f32 to vector<2x32xf32>
    %86 = arith.addf %85, %84 : vector<2x32xf32>
    %87 = arith.divf %85, %86 : vector<2x32xf32>
    %88 = vector.extract_strided_slice %75 {offsets = [0, 64], sizes = [2, 32], strides = [1, 1]} : vector<2x128xf32> to vector<2x32xf32>
    %89 = math.tanh %88 : vector<2x32xf32>
    %90 = vector.extract_strided_slice %75 {offsets = [0, 96], sizes = [2, 32], strides = [1, 1]} : vector<2x128xf32> to vector<2x32xf32>
    %91 = arith.negf %90 : vector<2x32xf32>
    %92 = math.exp %91 : vector<2x32xf32>
    %cst_27 = arith.constant 1.000000e+00 : f32
    %93 = vector.broadcast %cst_27 : f32 to vector<2x32xf32>
    %94 = arith.addf %93, %92 : vector<2x32xf32>
    %95 = arith.divf %93, %94 : vector<2x32xf32>
    %96 = arith.mulf %87, %68 : vector<2x32xf32>
    %97 = arith.mulf %81, %89 : vector<2x32xf32>
    %98 = arith.addf %96, %97 : vector<2x32xf32>
    %99 = math.tanh %98 : vector<2x32xf32>
    %100 = arith.mulf %95, %99 : vector<2x32xf32>
    %c4 = arith.constant 4 : index
    %c0_28 = arith.constant 0 : index
    %101 = vector.load %arg14[%c4, %c0_28] : memref<16x32xf32, #tpu.memory_space<vmem>>, vector<2x32xf32>
    tpu.vector_store %arg14[%c4, %c0_28], %100 {strides = array<i32>} : memref<16x32xf32, #tpu.memory_space<vmem>>, vector<2x32xf32>,
    %102 = vector.extract_strided_slice %7 {offsets = [6, 0], sizes = [2, 128], strides = [1, 1]} : vector<16x128xf32> to vector<2x128xf32>
    %103 = arith.truncf %100 : vector<2x32xf32> to vector<2x32xbf16>
    %cst_29 = arith.constant dense<0.000000e+00> : vector<2x128xf32>
    %104 = tpu.matmul %103, %2, %cst_29 {dimension_numbers = #tpu.dot_dimension_numbers<[1], [0], [0], [1], [0, 0, 1, 1], [], []>} : vector<2x32xbf16>, vector<32x128xbf16>, vector<2x128xf32> -> vector<2x128xf32>
    %105 = arith.addf %102, %104 : vector<2x128xf32>
    %106 = vector.extract_strided_slice %105 {offsets = [0, 0], sizes = [2, 32], strides = [1, 1]} : vector<2x128xf32> to vector<2x32xf32>
    %107 = arith.negf %106 : vector<2x32xf32>
    %108 = math.exp %107 : vector<2x32xf32>
    %cst_30 = arith.constant 1.000000e+00 : f32
    %109 = vector.broadcast %cst_30 : f32 to vector<2x32xf32>
    %110 = arith.addf %109, %108 : vector<2x32xf32>
    %111 = arith.divf %109, %110 : vector<2x32xf32>
    %112 = vector.extract_strided_slice %105 {offsets = [0, 32], sizes = [2, 32], strides = [1, 1]} : vector<2x128xf32> to vector<2x32xf32>
    %113 = arith.negf %112 : vector<2x32xf32>
    %114 = math.exp %113 : vector<2x32xf32>
    %cst_31 = arith.constant 1.000000e+00 : f32
    %115 = vector.broadcast %cst_31 : f32 to vector<2x32xf32>
    %116 = arith.addf %115, %114 : vector<2x32xf32>
    %117 = arith.divf %115, %116 : vector<2x32xf32>
    %118 = vector.extract_strided_slice %105 {offsets = [0, 64], sizes = [2, 32], strides = [1, 1]} : vector<2x128xf32> to vector<2x32xf32>
    %119 = math.tanh %118 : vector<2x32xf32>
    %120 = vector.extract_strided_slice %105 {offsets = [0, 96], sizes = [2, 32], strides = [1, 1]} : vector<2x128xf32> to vector<2x32xf32>
    %121 = arith.negf %120 : vector<2x32xf32>
    %122 = math.exp %121 : vector<2x32xf32>
    %cst_32 = arith.constant 1.000000e+00 : f32
    %123 = vector.broadcast %cst_32 : f32 to vector<2x32xf32>
    %124 = arith.addf %123, %122 : vector<2x32xf32>
    %125 = arith.divf %123, %124 : vector<2x32xf32>
    %126 = arith.mulf %117, %98 : vector<2x32xf32>
    %127 = arith.mulf %111, %119 : vector<2x32xf32>
    %128 = arith.addf %126, %127 : vector<2x32xf32>
    %129 = math.tanh %128 : vector<2x32xf32>
    %130 = arith.mulf %125, %129 : vector<2x32xf32>
    %c6 = arith.constant 6 : index
    %c0_33 = arith.constant 0 : index
    %131 = vector.load %arg14[%c6, %c0_33] : memref<16x32xf32, #tpu.memory_space<vmem>>, vector<2x32xf32>
    tpu.vector_store %arg14[%c6, %c0_33], %130 {strides = array<i32>} : memref<16x32xf32, #tpu.memory_space<vmem>>, vector<2x32xf32>,
    %132 = vector.extract_strided_slice %7 {offsets = [8, 0], sizes = [2, 128], strides = [1, 1]} : vector<16x128xf32> to vector<2x128xf32>
    %133 = arith.truncf %130 : vector<2x32xf32> to vector<2x32xbf16>
    %cst_34 = arith.constant dense<0.000000e+00> : vector<2x128xf32>
    %134 = tpu.matmul %133, %2, %cst_34 {dimension_numbers = #tpu.dot_dimension_numbers<[1], [0], [0], [1], [0, 0, 1, 1], [], []>} : vector<2x32xbf16>, vector<32x128xbf16>, vector<2x128xf32> -> vector<2x128xf32>
    %135 = arith.addf %132, %134 : vector<2x128xf32>
    %136 = vector.extract_strided_slice %135 {offsets = [0, 0], sizes = [2, 32], strides = [1, 1]} : vector<2x128xf32> to vector<2x32xf32>
    %137 = arith.negf %136 : vector<2x32xf32>
    %138 = math.exp %137 : vector<2x32xf32>
    %cst_35 = arith.constant 1.000000e+00 : f32
    %139 = vector.broadcast %cst_35 : f32 to vector<2x32xf32>
    %140 = arith.addf %139, %138 : vector<2x32xf32>
    %141 = arith.divf %139, %140 : vector<2x32xf32>
    %142 = vector.extract_strided_slice %135 {offsets = [0, 32], sizes = [2, 32], strides = [1, 1]} : vector<2x128xf32> to vector<2x32xf32>
    %143 = arith.negf %142 : vector<2x32xf32>
    %144 = math.exp %143 : vector<2x32xf32>
    %cst_36 = arith.constant 1.000000e+00 : f32
    %145 = vector.broadcast %cst_36 : f32 to vector<2x32xf32>
    %146 = arith.addf %145, %144 : vector<2x32xf32>
    %147 = arith.divf %145, %146 : vector<2x32xf32>
    %148 = vector.extract_strided_slice %135 {offsets = [0, 64], sizes = [2, 32], strides = [1, 1]} : vector<2x128xf32> to vector<2x32xf32>
    %149 = math.tanh %148 : vector<2x32xf32>
    %150 = vector.extract_strided_slice %135 {offsets = [0, 96], sizes = [2, 32], strides = [1, 1]} : vector<2x128xf32> to vector<2x32xf32>
    %151 = arith.negf %150 : vector<2x32xf32>
    %152 = math.exp %151 : vector<2x32xf32>
    %cst_37 = arith.constant 1.000000e+00 : f32
    %153 = vector.broadcast %cst_37 : f32 to vector<2x32xf32>
    %154 = arith.addf %153, %152 : vector<2x32xf32>
    %155 = arith.divf %153, %154 : vector<2x32xf32>
    %156 = arith.mulf %147, %128 : vector<2x32xf32>
    %157 = arith.mulf %141, %149 : vector<2x32xf32>
    %158 = arith.addf %156, %157 : vector<2x32xf32>
    %159 = math.tanh %158 : vector<2x32xf32>
    %160 = arith.mulf %155, %159 : vector<2x32xf32>
    %c8 = arith.constant 8 : index
    %c0_38 = arith.constant 0 : index
    %161 = vector.load %arg14[%c8, %c0_38] : memref<16x32xf32, #tpu.memory_space<vmem>>, vector<2x32xf32>
    tpu.vector_store %arg14[%c8, %c0_38], %160 {strides = array<i32>} : memref<16x32xf32, #tpu.memory_space<vmem>>, vector<2x32xf32>,
    %162 = vector.extract_strided_slice %7 {offsets = [10, 0], sizes = [2, 128], strides = [1, 1]} : vector<16x128xf32> to vector<2x128xf32>
    %163 = arith.truncf %160 : vector<2x32xf32> to vector<2x32xbf16>
    %cst_39 = arith.constant dense<0.000000e+00> : vector<2x128xf32>
    %164 = tpu.matmul %163, %2, %cst_39 {dimension_numbers = #tpu.dot_dimension_numbers<[1], [0], [0], [1], [0, 0, 1, 1], [], []>} : vector<2x32xbf16>, vector<32x128xbf16>, vector<2x128xf32> -> vector<2x128xf32>
    %165 = arith.addf %162, %164 : vector<2x128xf32>
    %166 = vector.extract_strided_slice %165 {offsets = [0, 0], sizes = [2, 32], strides = [1, 1]} : vector<2x128xf32> to vector<2x32xf32>
    %167 = arith.negf %166 : vector<2x32xf32>
    %168 = math.exp %167 : vector<2x32xf32>
    %cst_40 = arith.constant 1.000000e+00 : f32
    %169 = vector.broadcast %cst_40 : f32 to vector<2x32xf32>
    %170 = arith.addf %169, %168 : vector<2x32xf32>
    %171 = arith.divf %169, %170 : vector<2x32xf32>
    %172 = vector.extract_strided_slice %165 {offsets = [0, 32], sizes = [2, 32], strides = [1, 1]} : vector<2x128xf32> to vector<2x32xf32>
    %173 = arith.negf %172 : vector<2x32xf32>
    %174 = math.exp %173 : vector<2x32xf32>
    %cst_41 = arith.constant 1.000000e+00 : f32
    %175 = vector.broadcast %cst_41 : f32 to vector<2x32xf32>
    %176 = arith.addf %175, %174 : vector<2x32xf32>
    %177 = arith.divf %175, %176 : vector<2x32xf32>
    %178 = vector.extract_strided_slice %165 {offsets = [0, 64], sizes = [2, 32], strides = [1, 1]} : vector<2x128xf32> to vector<2x32xf32>
    %179 = math.tanh %178 : vector<2x32xf32>
    %180 = vector.extract_strided_slice %165 {offsets = [0, 96], sizes = [2, 32], strides = [1, 1]} : vector<2x128xf32> to vector<2x32xf32>
    %181 = arith.negf %180 : vector<2x32xf32>
    %182 = math.exp %181 : vector<2x32xf32>
    %cst_42 = arith.constant 1.000000e+00 : f32
    %183 = vector.broadcast %cst_42 : f32 to vector<2x32xf32>
    %184 = arith.addf %183, %182 : vector<2x32xf32>
    %185 = arith.divf %183, %184 : vector<2x32xf32>
    %186 = arith.mulf %177, %158 : vector<2x32xf32>
    %187 = arith.mulf %171, %179 : vector<2x32xf32>
    %188 = arith.addf %186, %187 : vector<2x32xf32>
    %189 = math.tanh %188 : vector<2x32xf32>
    %190 = arith.mulf %185, %189 : vector<2x32xf32>
    %c10 = arith.constant 10 : index
    %c0_43 = arith.constant 0 : index
    %191 = vector.load %arg14[%c10, %c0_43] : memref<16x32xf32, #tpu.memory_space<vmem>>, vector<2x32xf32>
    tpu.vector_store %arg14[%c10, %c0_43], %190 {strides = array<i32>} : memref<16x32xf32, #tpu.memory_space<vmem>>, vector<2x32xf32>,
    %192 = vector.extract_strided_slice %7 {offsets = [12, 0], sizes = [2, 128], strides = [1, 1]} : vector<16x128xf32> to vector<2x128xf32>
    %193 = arith.truncf %190 : vector<2x32xf32> to vector<2x32xbf16>
    %cst_44 = arith.constant dense<0.000000e+00> : vector<2x128xf32>
    %194 = tpu.matmul %193, %2, %cst_44 {dimension_numbers = #tpu.dot_dimension_numbers<[1], [0], [0], [1], [0, 0, 1, 1], [], []>} : vector<2x32xbf16>, vector<32x128xbf16>, vector<2x128xf32> -> vector<2x128xf32>
    %195 = arith.addf %192, %194 : vector<2x128xf32>
    %196 = vector.extract_strided_slice %195 {offsets = [0, 0], sizes = [2, 32], strides = [1, 1]} : vector<2x128xf32> to vector<2x32xf32>
    %197 = arith.negf %196 : vector<2x32xf32>
    %198 = math.exp %197 : vector<2x32xf32>
    %cst_45 = arith.constant 1.000000e+00 : f32
    %199 = vector.broadcast %cst_45 : f32 to vector<2x32xf32>
    %200 = arith.addf %199, %198 : vector<2x32xf32>
    %201 = arith.divf %199, %200 : vector<2x32xf32>
    %202 = vector.extract_strided_slice %195 {offsets = [0, 32], sizes = [2, 32], strides = [1, 1]} : vector<2x128xf32> to vector<2x32xf32>
    %203 = arith.negf %202 : vector<2x32xf32>
    %204 = math.exp %203 : vector<2x32xf32>
    %cst_46 = arith.constant 1.000000e+00 : f32
    %205 = vector.broadcast %cst_46 : f32 to vector<2x32xf32>
    %206 = arith.addf %205, %204 : vector<2x32xf32>
    %207 = arith.divf %205, %206 : vector<2x32xf32>
    %208 = vector.extract_strided_slice %195 {offsets = [0, 64], sizes = [2, 32], strides = [1, 1]} : vector<2x128xf32> to vector<2x32xf32>
    %209 = math.tanh %208 : vector<2x32xf32>
    %210 = vector.extract_strided_slice %195 {offsets = [0, 96], sizes = [2, 32], strides = [1, 1]} : vector<2x128xf32> to vector<2x32xf32>
    %211 = arith.negf %210 : vector<2x32xf32>
    %212 = math.exp %211 : vector<2x32xf32>
    %cst_47 = arith.constant 1.000000e+00 : f32
    %213 = vector.broadcast %cst_47 : f32 to vector<2x32xf32>
    %214 = arith.addf %213, %212 : vector<2x32xf32>
    %215 = arith.divf %213, %214 : vector<2x32xf32>
    %216 = arith.mulf %207, %188 : vector<2x32xf32>
    %217 = arith.mulf %201, %209 : vector<2x32xf32>
    %218 = arith.addf %216, %217 : vector<2x32xf32>
    %219 = math.tanh %218 : vector<2x32xf32>
    %220 = arith.mulf %215, %219 : vector<2x32xf32>
    %c12 = arith.constant 12 : index
    %c0_48 = arith.constant 0 : index
    %221 = vector.load %arg14[%c12, %c0_48] : memref<16x32xf32, #tpu.memory_space<vmem>>, vector<2x32xf32>
    tpu.vector_store %arg14[%c12, %c0_48], %220 {strides = array<i32>} : memref<16x32xf32, #tpu.memory_space<vmem>>, vector<2x32xf32>,
    %222 = vector.extract_strided_slice %7 {offsets = [14, 0], sizes = [2, 128], strides = [1, 1]} : vector<16x128xf32> to vector<2x128xf32>
    %223 = arith.truncf %220 : vector<2x32xf32> to vector<2x32xbf16>
    %cst_49 = arith.constant dense<0.000000e+00> : vector<2x128xf32>
    %224 = tpu.matmul %223, %2, %cst_49 {dimension_numbers = #tpu.dot_dimension_numbers<[1], [0], [0], [1], [0, 0, 1, 1], [], []>} : vector<2x32xbf16>, vector<32x128xbf16>, vector<2x128xf32> -> vector<2x128xf32>
    %225 = arith.addf %222, %224 : vector<2x128xf32>
    %226 = vector.extract_strided_slice %225 {offsets = [0, 0], sizes = [2, 32], strides = [1, 1]} : vector<2x128xf32> to vector<2x32xf32>
    %227 = arith.negf %226 : vector<2x32xf32>
    %228 = math.exp %227 : vector<2x32xf32>
    %cst_50 = arith.constant 1.000000e+00 : f32
    %229 = vector.broadcast %cst_50 : f32 to vector<2x32xf32>
    %230 = arith.addf %229, %228 : vector<2x32xf32>
    %231 = arith.divf %229, %230 : vector<2x32xf32>
    %232 = vector.extract_strided_slice %225 {offsets = [0, 32], sizes = [2, 32], strides = [1, 1]} : vector<2x128xf32> to vector<2x32xf32>
    %233 = arith.negf %232 : vector<2x32xf32>
    %234 = math.exp %233 : vector<2x32xf32>
    %cst_51 = arith.constant 1.000000e+00 : f32
    %235 = vector.broadcast %cst_51 : f32 to vector<2x32xf32>
    %236 = arith.addf %235, %234 : vector<2x32xf32>
    %237 = arith.divf %235, %236 : vector<2x32xf32>
    %238 = vector.extract_strided_slice %225 {offsets = [0, 64], sizes = [2, 32], strides = [1, 1]} : vector<2x128xf32> to vector<2x32xf32>
    %239 = math.tanh %238 : vector<2x32xf32>
    %240 = vector.extract_strided_slice %225 {offsets = [0, 96], sizes = [2, 32], strides = [1, 1]} : vector<2x128xf32> to vector<2x32xf32>
    %241 = arith.negf %240 : vector<2x32xf32>
    %242 = math.exp %241 : vector<2x32xf32>
    %cst_52 = arith.constant 1.000000e+00 : f32
    %243 = vector.broadcast %cst_52 : f32 to vector<2x32xf32>
    %244 = arith.addf %243, %242 : vector<2x32xf32>
    %245 = arith.divf %243, %244 : vector<2x32xf32>
    %246 = arith.mulf %237, %218 : vector<2x32xf32>
    %247 = arith.mulf %231, %239 : vector<2x32xf32>
    %248 = arith.addf %246, %247 : vector<2x32xf32>
    %249 = math.tanh %248 : vector<2x32xf32>
    %250 = arith.mulf %245, %249 : vector<2x32xf32>
    %c14 = arith.constant 14 : index
    %c0_53 = arith.constant 0 : index
    %251 = vector.load %arg14[%c14, %c0_53] : memref<16x32xf32, #tpu.memory_space<vmem>>, vector<2x32xf32>
    tpu.vector_store %arg14[%c14, %c0_53], %250 {strides = array<i32>} : memref<16x32xf32, #tpu.memory_space<vmem>>, vector<2x32xf32>,
    %c0_54 = arith.constant 0 : index
    %c0_55 = arith.constant 0 : index
    %c0_56 = arith.constant 0 : index
    %252 = vector.load %arg12[%c0_54, %c0_55, %c0_56] : memref<2x2x32xf32, #tpu.memory_space<vmem>>, vector<1x2x32xf32>
    %253 = vector.shape_cast %252 : vector<1x2x32xf32> to vector<2x32xf32>
    %254 = vector.shape_cast %250 : vector<2x32xf32> to vector<1x2x32xf32>
    tpu.vector_store %arg12[%c0_54, %c0_55, %c0_56], %254 {strides = array<i32>} : memref<2x2x32xf32, #tpu.memory_space<vmem>>, vector<1x2x32xf32>,
    %c0_57 = arith.constant 0 : index
    %c0_58 = arith.constant 0 : index
    %c0_59 = arith.constant 0 : index
    %255 = vector.load %arg13[%c0_57, %c0_58, %c0_59] : memref<2x2x32xf32, #tpu.memory_space<vmem>>, vector<1x2x32xf32>
    %256 = vector.shape_cast %255 : vector<1x2x32xf32> to vector<2x32xf32>
    %257 = vector.shape_cast %248 : vector<2x32xf32> to vector<1x2x32xf32>
    tpu.vector_store %arg13[%c0_57, %c0_58, %c0_59], %257 {strides = array<i32>} : memref<2x2x32xf32, #tpu.memory_space<vmem>>, vector<1x2x32xf32>,
    %c0_60 = arith.constant 0 : index
    %c0_61 = arith.constant 0 : index
    %258 = vector.load %arg14[%c0_60, %c0_61] : memref<16x32xf32, #tpu.memory_space<vmem>>, vector<16x32xf32>
    %c0_62 = arith.constant 0 : index
    %c0_63 = arith.constant 0 : index
    %259 = vector.load %arg6[%c0_62, %c0_63] : memref<32x128xbf16, #tpu.memory_space<vmem>>, vector<32x128xbf16>
    %c0_64 = arith.constant 0 : index
    %c0_65 = arith.constant 0 : index
    %260 = vector.load %arg7[%c0_64, %c0_65] : memref<32x128xbf16, #tpu.memory_space<vmem>>, vector<32x128xbf16>
    %c0_66 = arith.constant 0 : index
    %c0_67 = arith.constant 0 : index
    %261 = vector.load %arg8[%c0_66, %c0_67] : memref<1x128xf32, #tpu.memory_space<vmem>>, vector<1x128xf32>
    %262 = arith.truncf %258 : vector<16x32xf32> to vector<16x32xbf16>
    %cst_68 = arith.constant dense<0.000000e+00> : vector<16x128xf32>
    %263 = tpu.matmul %262, %259, %cst_68 {dimension_numbers = #tpu.dot_dimension_numbers<[1], [0], [0], [1], [0, 0, 1, 1], [], []>} : vector<16x32xbf16>, vector<32x128xbf16>, vector<16x128xf32> -> vector<16x128xf32>
    %264 = vector.broadcast %261 : vector<1x128xf32> to vector<16x128xf32>
    %265 = arith.addf %263, %264 : vector<16x128xf32>
    %c1 = arith.constant 1 : index
    %c0_69 = arith.constant 0 : index
    %c0_70 = arith.constant 0 : index
    %266 = vector.load %arg1[%c1, %c0_69, %c0_70] : memref<2x2x32xf32, #tpu.memory_space<vmem>>, vector<1x2x32xf32>
    %267 = vector.shape_cast %266 : vector<1x2x32xf32> to vector<2x32xf32>
    %c1_71 = arith.constant 1 : index
    %c0_72 = arith.constant 0 : index
    %c0_73 = arith.constant 0 : index
    %268 = vector.load %arg2[%c1_71, %c0_72, %c0_73] : memref<2x2x32xf32, #tpu.memory_space<vmem>>, vector<1x2x32xf32>
    %269 = vector.shape_cast %268 : vector<1x2x32xf32> to vector<2x32xf32>
    %270 = vector.extract_strided_slice %265 {offsets = [0, 0], sizes = [2, 128], strides = [1, 1]} : vector<16x128xf32> to vector<2x128xf32>
    %271 = arith.truncf %267 : vector<2x32xf32> to vector<2x32xbf16>
    %cst_74 = arith.constant dense<0.000000e+00> : vector<2x128xf32>
    %272 = tpu.matmul %271, %260, %cst_74 {dimension_numbers = #tpu.dot_dimension_numbers<[1], [0], [0], [1], [0, 0, 1, 1], [], []>} : vector<2x32xbf16>, vector<32x128xbf16>, vector<2x128xf32> -> vector<2x128xf32>
    %273 = arith.addf %270, %272 : vector<2x128xf32>
    %274 = vector.extract_strided_slice %273 {offsets = [0, 0], sizes = [2, 32], strides = [1, 1]} : vector<2x128xf32> to vector<2x32xf32>
    %275 = arith.negf %274 : vector<2x32xf32>
    %276 = math.exp %275 : vector<2x32xf32>
    %cst_75 = arith.constant 1.000000e+00 : f32
    %277 = vector.broadcast %cst_75 : f32 to vector<2x32xf32>
    %278 = arith.addf %277, %276 : vector<2x32xf32>
    %279 = arith.divf %277, %278 : vector<2x32xf32>
    %280 = vector.extract_strided_slice %273 {offsets = [0, 32], sizes = [2, 32], strides = [1, 1]} : vector<2x128xf32> to vector<2x32xf32>
    %281 = arith.negf %280 : vector<2x32xf32>
    %282 = math.exp %281 : vector<2x32xf32>
    %cst_76 = arith.constant 1.000000e+00 : f32
    %283 = vector.broadcast %cst_76 : f32 to vector<2x32xf32>
    %284 = arith.addf %283, %282 : vector<2x32xf32>
    %285 = arith.divf %283, %284 : vector<2x32xf32>
    %286 = vector.extract_strided_slice %273 {offsets = [0, 64], sizes = [2, 32], strides = [1, 1]} : vector<2x128xf32> to vector<2x32xf32>
    %287 = math.tanh %286 : vector<2x32xf32>
    %288 = vector.extract_strided_slice %273 {offsets = [0, 96], sizes = [2, 32], strides = [1, 1]} : vector<2x128xf32> to vector<2x32xf32>
    %289 = arith.negf %288 : vector<2x32xf32>
    %290 = math.exp %289 : vector<2x32xf32>
    %cst_77 = arith.constant 1.000000e+00 : f32
    %291 = vector.broadcast %cst_77 : f32 to vector<2x32xf32>
    %292 = arith.addf %291, %290 : vector<2x32xf32>
    %293 = arith.divf %291, %292 : vector<2x32xf32>
    %294 = arith.mulf %285, %269 : vector<2x32xf32>
    %295 = arith.mulf %279, %287 : vector<2x32xf32>
    %296 = arith.addf %294, %295 : vector<2x32xf32>
    %297 = math.tanh %296 : vector<2x32xf32>
    %298 = arith.mulf %293, %297 : vector<2x32xf32>
    %c0_78 = arith.constant 0 : index
    %c0_79 = arith.constant 0 : index
    %299 = vector.load %arg14[%c0_78, %c0_79] : memref<16x32xf32, #tpu.memory_space<vmem>>, vector<2x32xf32>
    tpu.vector_store %arg14[%c0_78, %c0_79], %298 {strides = array<i32>} : memref<16x32xf32, #tpu.memory_space<vmem>>, vector<2x32xf32>,
    %300 = vector.extract_strided_slice %265 {offsets = [2, 0], sizes = [2, 128], strides = [1, 1]} : vector<16x128xf32> to vector<2x128xf32>
    %301 = arith.truncf %298 : vector<2x32xf32> to vector<2x32xbf16>
    %cst_80 = arith.constant dense<0.000000e+00> : vector<2x128xf32>
    %302 = tpu.matmul %301, %260, %cst_80 {dimension_numbers = #tpu.dot_dimension_numbers<[1], [0], [0], [1], [0, 0, 1, 1], [], []>} : vector<2x32xbf16>, vector<32x128xbf16>, vector<2x128xf32> -> vector<2x128xf32>
    %303 = arith.addf %300, %302 : vector<2x128xf32>
    %304 = vector.extract_strided_slice %303 {offsets = [0, 0], sizes = [2, 32], strides = [1, 1]} : vector<2x128xf32> to vector<2x32xf32>
    %305 = arith.negf %304 : vector<2x32xf32>
    %306 = math.exp %305 : vector<2x32xf32>
    %cst_81 = arith.constant 1.000000e+00 : f32
    %307 = vector.broadcast %cst_81 : f32 to vector<2x32xf32>
    %308 = arith.addf %307, %306 : vector<2x32xf32>
    %309 = arith.divf %307, %308 : vector<2x32xf32>
    %310 = vector.extract_strided_slice %303 {offsets = [0, 32], sizes = [2, 32], strides = [1, 1]} : vector<2x128xf32> to vector<2x32xf32>
    %311 = arith.negf %310 : vector<2x32xf32>
    %312 = math.exp %311 : vector<2x32xf32>
    %cst_82 = arith.constant 1.000000e+00 : f32
    %313 = vector.broadcast %cst_82 : f32 to vector<2x32xf32>
    %314 = arith.addf %313, %312 : vector<2x32xf32>
    %315 = arith.divf %313, %314 : vector<2x32xf32>
    %316 = vector.extract_strided_slice %303 {offsets = [0, 64], sizes = [2, 32], strides = [1, 1]} : vector<2x128xf32> to vector<2x32xf32>
    %317 = math.tanh %316 : vector<2x32xf32>
    %318 = vector.extract_strided_slice %303 {offsets = [0, 96], sizes = [2, 32], strides = [1, 1]} : vector<2x128xf32> to vector<2x32xf32>
    %319 = arith.negf %318 : vector<2x32xf32>
    %320 = math.exp %319 : vector<2x32xf32>
    %cst_83 = arith.constant 1.000000e+00 : f32
    %321 = vector.broadcast %cst_83 : f32 to vector<2x32xf32>
    %322 = arith.addf %321, %320 : vector<2x32xf32>
    %323 = arith.divf %321, %322 : vector<2x32xf32>
    %324 = arith.mulf %315, %296 : vector<2x32xf32>
    %325 = arith.mulf %309, %317 : vector<2x32xf32>
    %326 = arith.addf %324, %325 : vector<2x32xf32>
    %327 = math.tanh %326 : vector<2x32xf32>
    %328 = arith.mulf %323, %327 : vector<2x32xf32>
    %c2_84 = arith.constant 2 : index
    %c0_85 = arith.constant 0 : index
    %329 = vector.load %arg14[%c2_84, %c0_85] : memref<16x32xf32, #tpu.memory_space<vmem>>, vector<2x32xf32>
    tpu.vector_store %arg14[%c2_84, %c0_85], %328 {strides = array<i32>} : memref<16x32xf32, #tpu.memory_space<vmem>>, vector<2x32xf32>,
    %330 = vector.extract_strided_slice %265 {offsets = [4, 0], sizes = [2, 128], strides = [1, 1]} : vector<16x128xf32> to vector<2x128xf32>
    %331 = arith.truncf %328 : vector<2x32xf32> to vector<2x32xbf16>
    %cst_86 = arith.constant dense<0.000000e+00> : vector<2x128xf32>
    %332 = tpu.matmul %331, %260, %cst_86 {dimension_numbers = #tpu.dot_dimension_numbers<[1], [0], [0], [1], [0, 0, 1, 1], [], []>} : vector<2x32xbf16>, vector<32x128xbf16>, vector<2x128xf32> -> vector<2x128xf32>
    %333 = arith.addf %330, %332 : vector<2x128xf32>
    %334 = vector.extract_strided_slice %333 {offsets = [0, 0], sizes = [2, 32], strides = [1, 1]} : vector<2x128xf32> to vector<2x32xf32>
    %335 = arith.negf %334 : vector<2x32xf32>
    %336 = math.exp %335 : vector<2x32xf32>
    %cst_87 = arith.constant 1.000000e+00 : f32
    %337 = vector.broadcast %cst_87 : f32 to vector<2x32xf32>
    %338 = arith.addf %337, %336 : vector<2x32xf32>
    %339 = arith.divf %337, %338 : vector<2x32xf32>
    %340 = vector.extract_strided_slice %333 {offsets = [0, 32], sizes = [2, 32], strides = [1, 1]} : vector<2x128xf32> to vector<2x32xf32>
    %341 = arith.negf %340 : vector<2x32xf32>
    %342 = math.exp %341 : vector<2x32xf32>
    %cst_88 = arith.constant 1.000000e+00 : f32
    %343 = vector.broadcast %cst_88 : f32 to vector<2x32xf32>
    %344 = arith.addf %343, %342 : vector<2x32xf32>
    %345 = arith.divf %343, %344 : vector<2x32xf32>
    %346 = vector.extract_strided_slice %333 {offsets = [0, 64], sizes = [2, 32], strides = [1, 1]} : vector<2x128xf32> to vector<2x32xf32>
    %347 = math.tanh %346 : vector<2x32xf32>
    %348 = vector.extract_strided_slice %333 {offsets = [0, 96], sizes = [2, 32], strides = [1, 1]} : vector<2x128xf32> to vector<2x32xf32>
    %349 = arith.negf %348 : vector<2x32xf32>
    %350 = math.exp %349 : vector<2x32xf32>
    %cst_89 = arith.constant 1.000000e+00 : f32
    %351 = vector.broadcast %cst_89 : f32 to vector<2x32xf32>
    %352 = arith.addf %351, %350 : vector<2x32xf32>
    %353 = arith.divf %351, %352 : vector<2x32xf32>
    %354 = arith.mulf %345, %326 : vector<2x32xf32>
    %355 = arith.mulf %339, %347 : vector<2x32xf32>
    %356 = arith.addf %354, %355 : vector<2x32xf32>
    %357 = math.tanh %356 : vector<2x32xf32>
    %358 = arith.mulf %353, %357 : vector<2x32xf32>
    %c4_90 = arith.constant 4 : index
    %c0_91 = arith.constant 0 : index
    %359 = vector.load %arg14[%c4_90, %c0_91] : memref<16x32xf32, #tpu.memory_space<vmem>>, vector<2x32xf32>
    tpu.vector_store %arg14[%c4_90, %c0_91], %358 {strides = array<i32>} : memref<16x32xf32, #tpu.memory_space<vmem>>, vector<2x32xf32>,
    %360 = vector.extract_strided_slice %265 {offsets = [6, 0], sizes = [2, 128], strides = [1, 1]} : vector<16x128xf32> to vector<2x128xf32>
    %361 = arith.truncf %358 : vector<2x32xf32> to vector<2x32xbf16>
    %cst_92 = arith.constant dense<0.000000e+00> : vector<2x128xf32>
    %362 = tpu.matmul %361, %260, %cst_92 {dimension_numbers = #tpu.dot_dimension_numbers<[1], [0], [0], [1], [0, 0, 1, 1], [], []>} : vector<2x32xbf16>, vector<32x128xbf16>, vector<2x128xf32> -> vector<2x128xf32>
    %363 = arith.addf %360, %362 : vector<2x128xf32>
    %364 = vector.extract_strided_slice %363 {offsets = [0, 0], sizes = [2, 32], strides = [1, 1]} : vector<2x128xf32> to vector<2x32xf32>
    %365 = arith.negf %364 : vector<2x32xf32>
    %366 = math.exp %365 : vector<2x32xf32>
    %cst_93 = arith.constant 1.000000e+00 : f32
    %367 = vector.broadcast %cst_93 : f32 to vector<2x32xf32>
    %368 = arith.addf %367, %366 : vector<2x32xf32>
    %369 = arith.divf %367, %368 : vector<2x32xf32>
    %370 = vector.extract_strided_slice %363 {offsets = [0, 32], sizes = [2, 32], strides = [1, 1]} : vector<2x128xf32> to vector<2x32xf32>
    %371 = arith.negf %370 : vector<2x32xf32>
    %372 = math.exp %371 : vector<2x32xf32>
    %cst_94 = arith.constant 1.000000e+00 : f32
    %373 = vector.broadcast %cst_94 : f32 to vector<2x32xf32>
    %374 = arith.addf %373, %372 : vector<2x32xf32>
    %375 = arith.divf %373, %374 : vector<2x32xf32>
    %376 = vector.extract_strided_slice %363 {offsets = [0, 64], sizes = [2, 32], strides = [1, 1]} : vector<2x128xf32> to vector<2x32xf32>
    %377 = math.tanh %376 : vector<2x32xf32>
    %378 = vector.extract_strided_slice %363 {offsets = [0, 96], sizes = [2, 32], strides = [1, 1]} : vector<2x128xf32> to vector<2x32xf32>
    %379 = arith.negf %378 : vector<2x32xf32>
    %380 = math.exp %379 : vector<2x32xf32>
    %cst_95 = arith.constant 1.000000e+00 : f32
    %381 = vector.broadcast %cst_95 : f32 to vector<2x32xf32>
    %382 = arith.addf %381, %380 : vector<2x32xf32>
    %383 = arith.divf %381, %382 : vector<2x32xf32>
    %384 = arith.mulf %375, %356 : vector<2x32xf32>
    %385 = arith.mulf %369, %377 : vector<2x32xf32>
    %386 = arith.addf %384, %385 : vector<2x32xf32>
    %387 = math.tanh %386 : vector<2x32xf32>
    %388 = arith.mulf %383, %387 : vector<2x32xf32>
    %c6_96 = arith.constant 6 : index
    %c0_97 = arith.constant 0 : index
    %389 = vector.load %arg14[%c6_96, %c0_97] : memref<16x32xf32, #tpu.memory_space<vmem>>, vector<2x32xf32>
    tpu.vector_store %arg14[%c6_96, %c0_97], %388 {strides = array<i32>} : memref<16x32xf32, #tpu.memory_space<vmem>>, vector<2x32xf32>,
    %390 = vector.extract_strided_slice %265 {offsets = [8, 0], sizes = [2, 128], strides = [1, 1]} : vector<16x128xf32> to vector<2x128xf32>
    %391 = arith.truncf %388 : vector<2x32xf32> to vector<2x32xbf16>
    %cst_98 = arith.constant dense<0.000000e+00> : vector<2x128xf32>
    %392 = tpu.matmul %391, %260, %cst_98 {dimension_numbers = #tpu.dot_dimension_numbers<[1], [0], [0], [1], [0, 0, 1, 1], [], []>} : vector<2x32xbf16>, vector<32x128xbf16>, vector<2x128xf32> -> vector<2x128xf32>
    %393 = arith.addf %390, %392 : vector<2x128xf32>
    %394 = vector.extract_strided_slice %393 {offsets = [0, 0], sizes = [2, 32], strides = [1, 1]} : vector<2x128xf32> to vector<2x32xf32>
    %395 = arith.negf %394 : vector<2x32xf32>
    %396 = math.exp %395 : vector<2x32xf32>
    %cst_99 = arith.constant 1.000000e+00 : f32
    %397 = vector.broadcast %cst_99 : f32 to vector<2x32xf32>
    %398 = arith.addf %397, %396 : vector<2x32xf32>
    %399 = arith.divf %397, %398 : vector<2x32xf32>
    %400 = vector.extract_strided_slice %393 {offsets = [0, 32], sizes = [2, 32], strides = [1, 1]} : vector<2x128xf32> to vector<2x32xf32>
    %401 = arith.negf %400 : vector<2x32xf32>
    %402 = math.exp %401 : vector<2x32xf32>
    %cst_100 = arith.constant 1.000000e+00 : f32
    %403 = vector.broadcast %cst_100 : f32 to vector<2x32xf32>
    %404 = arith.addf %403, %402 : vector<2x32xf32>
    %405 = arith.divf %403, %404 : vector<2x32xf32>
    %406 = vector.extract_strided_slice %393 {offsets = [0, 64], sizes = [2, 32], strides = [1, 1]} : vector<2x128xf32> to vector<2x32xf32>
    %407 = math.tanh %406 : vector<2x32xf32>
    %408 = vector.extract_strided_slice %393 {offsets = [0, 96], sizes = [2, 32], strides = [1, 1]} : vector<2x128xf32> to vector<2x32xf32>
    %409 = arith.negf %408 : vector<2x32xf32>
    %410 = math.exp %409 : vector<2x32xf32>
    %cst_101 = arith.constant 1.000000e+00 : f32
    %411 = vector.broadcast %cst_101 : f32 to vector<2x32xf32>
    %412 = arith.addf %411, %410 : vector<2x32xf32>
    %413 = arith.divf %411, %412 : vector<2x32xf32>
    %414 = arith.mulf %405, %386 : vector<2x32xf32>
    %415 = arith.mulf %399, %407 : vector<2x32xf32>
    %416 = arith.addf %414, %415 : vector<2x32xf32>
    %417 = math.tanh %416 : vector<2x32xf32>
    %418 = arith.mulf %413, %417 : vector<2x32xf32>
    %c8_102 = arith.constant 8 : index
    %c0_103 = arith.constant 0 : index
    %419 = vector.load %arg14[%c8_102, %c0_103] : memref<16x32xf32, #tpu.memory_space<vmem>>, vector<2x32xf32>
    tpu.vector_store %arg14[%c8_102, %c0_103], %418 {strides = array<i32>} : memref<16x32xf32, #tpu.memory_space<vmem>>, vector<2x32xf32>,
    %420 = vector.extract_strided_slice %265 {offsets = [10, 0], sizes = [2, 128], strides = [1, 1]} : vector<16x128xf32> to vector<2x128xf32>
    %421 = arith.truncf %418 : vector<2x32xf32> to vector<2x32xbf16>
    %cst_104 = arith.constant dense<0.000000e+00> : vector<2x128xf32>
    %422 = tpu.matmul %421, %260, %cst_104 {dimension_numbers = #tpu.dot_dimension_numbers<[1], [0], [0], [1], [0, 0, 1, 1], [], []>} : vector<2x32xbf16>, vector<32x128xbf16>, vector<2x128xf32> -> vector<2x128xf32>
    %423 = arith.addf %420, %422 : vector<2x128xf32>
    %424 = vector.extract_strided_slice %423 {offsets = [0, 0], sizes = [2, 32], strides = [1, 1]} : vector<2x128xf32> to vector<2x32xf32>
    %425 = arith.negf %424 : vector<2x32xf32>
    %426 = math.exp %425 : vector<2x32xf32>
    %cst_105 = arith.constant 1.000000e+00 : f32
    %427 = vector.broadcast %cst_105 : f32 to vector<2x32xf32>
    %428 = arith.addf %427, %426 : vector<2x32xf32>
    %429 = arith.divf %427, %428 : vector<2x32xf32>
    %430 = vector.extract_strided_slice %423 {offsets = [0, 32], sizes = [2, 32], strides = [1, 1]} : vector<2x128xf32> to vector<2x32xf32>
    %431 = arith.negf %430 : vector<2x32xf32>
    %432 = math.exp %431 : vector<2x32xf32>
    %cst_106 = arith.constant 1.000000e+00 : f32
    %433 = vector.broadcast %cst_106 : f32 to vector<2x32xf32>
    %434 = arith.addf %433, %432 : vector<2x32xf32>
    %435 = arith.divf %433, %434 : vector<2x32xf32>
    %436 = vector.extract_strided_slice %423 {offsets = [0, 64], sizes = [2, 32], strides = [1, 1]} : vector<2x128xf32> to vector<2x32xf32>
    %437 = math.tanh %436 : vector<2x32xf32>
    %438 = vector.extract_strided_slice %423 {offsets = [0, 96], sizes = [2, 32], strides = [1, 1]} : vector<2x128xf32> to vector<2x32xf32>
    %439 = arith.negf %438 : vector<2x32xf32>
    %440 = math.exp %439 : vector<2x32xf32>
    %cst_107 = arith.constant 1.000000e+00 : f32
    %441 = vector.broadcast %cst_107 : f32 to vector<2x32xf32>
    %442 = arith.addf %441, %440 : vector<2x32xf32>
    %443 = arith.divf %441, %442 : vector<2x32xf32>
    %444 = arith.mulf %435, %416 : vector<2x32xf32>
    %445 = arith.mulf %429, %437 : vector<2x32xf32>
    %446 = arith.addf %444, %445 : vector<2x32xf32>
    %447 = math.tanh %446 : vector<2x32xf32>
    %448 = arith.mulf %443, %447 : vector<2x32xf32>
    %c10_108 = arith.constant 10 : index
    %c0_109 = arith.constant 0 : index
    %449 = vector.load %arg14[%c10_108, %c0_109] : memref<16x32xf32, #tpu.memory_space<vmem>>, vector<2x32xf32>
    tpu.vector_store %arg14[%c10_108, %c0_109], %448 {strides = array<i32>} : memref<16x32xf32, #tpu.memory_space<vmem>>, vector<2x32xf32>,
    %450 = vector.extract_strided_slice %265 {offsets = [12, 0], sizes = [2, 128], strides = [1, 1]} : vector<16x128xf32> to vector<2x128xf32>
    %451 = arith.truncf %448 : vector<2x32xf32> to vector<2x32xbf16>
    %cst_110 = arith.constant dense<0.000000e+00> : vector<2x128xf32>
    %452 = tpu.matmul %451, %260, %cst_110 {dimension_numbers = #tpu.dot_dimension_numbers<[1], [0], [0], [1], [0, 0, 1, 1], [], []>} : vector<2x32xbf16>, vector<32x128xbf16>, vector<2x128xf32> -> vector<2x128xf32>
    %453 = arith.addf %450, %452 : vector<2x128xf32>
    %454 = vector.extract_strided_slice %453 {offsets = [0, 0], sizes = [2, 32], strides = [1, 1]} : vector<2x128xf32> to vector<2x32xf32>
    %455 = arith.negf %454 : vector<2x32xf32>
    %456 = math.exp %455 : vector<2x32xf32>
    %cst_111 = arith.constant 1.000000e+00 : f32
    %457 = vector.broadcast %cst_111 : f32 to vector<2x32xf32>
    %458 = arith.addf %457, %456 : vector<2x32xf32>
    %459 = arith.divf %457, %458 : vector<2x32xf32>
    %460 = vector.extract_strided_slice %453 {offsets = [0, 32], sizes = [2, 32], strides = [1, 1]} : vector<2x128xf32> to vector<2x32xf32>
    %461 = arith.negf %460 : vector<2x32xf32>
    %462 = math.exp %461 : vector<2x32xf32>
    %cst_112 = arith.constant 1.000000e+00 : f32
    %463 = vector.broadcast %cst_112 : f32 to vector<2x32xf32>
    %464 = arith.addf %463, %462 : vector<2x32xf32>
    %465 = arith.divf %463, %464 : vector<2x32xf32>
    %466 = vector.extract_strided_slice %453 {offsets = [0, 64], sizes = [2, 32], strides = [1, 1]} : vector<2x128xf32> to vector<2x32xf32>
    %467 = math.tanh %466 : vector<2x32xf32>
    %468 = vector.extract_strided_slice %453 {offsets = [0, 96], sizes = [2, 32], strides = [1, 1]} : vector<2x128xf32> to vector<2x32xf32>
    %469 = arith.negf %468 : vector<2x32xf32>
    %470 = math.exp %469 : vector<2x32xf32>
    %cst_113 = arith.constant 1.000000e+00 : f32
    %471 = vector.broadcast %cst_113 : f32 to vector<2x32xf32>
    %472 = arith.addf %471, %470 : vector<2x32xf32>
    %473 = arith.divf %471, %472 : vector<2x32xf32>
    %474 = arith.mulf %465, %446 : vector<2x32xf32>
    %475 = arith.mulf %459, %467 : vector<2x32xf32>
    %476 = arith.addf %474, %475 : vector<2x32xf32>
    %477 = math.tanh %476 : vector<2x32xf32>
    %478 = arith.mulf %473, %477 : vector<2x32xf32>
    %c12_114 = arith.constant 12 : index
    %c0_115 = arith.constant 0 : index
    %479 = vector.load %arg14[%c12_114, %c0_115] : memref<16x32xf32, #tpu.memory_space<vmem>>, vector<2x32xf32>
    tpu.vector_store %arg14[%c12_114, %c0_115], %478 {strides = array<i32>} : memref<16x32xf32, #tpu.memory_space<vmem>>, vector<2x32xf32>,
    %480 = vector.extract_strided_slice %265 {offsets = [14, 0], sizes = [2, 128], strides = [1, 1]} : vector<16x128xf32> to vector<2x128xf32>
    %481 = arith.truncf %478 : vector<2x32xf32> to vector<2x32xbf16>
    %cst_116 = arith.constant dense<0.000000e+00> : vector<2x128xf32>
    %482 = tpu.matmul %481, %260, %cst_116 {dimension_numbers = #tpu.dot_dimension_numbers<[1], [0], [0], [1], [0, 0, 1, 1], [], []>} : vector<2x32xbf16>, vector<32x128xbf16>, vector<2x128xf32> -> vector<2x128xf32>
    %483 = arith.addf %480, %482 : vector<2x128xf32>
    %484 = vector.extract_strided_slice %483 {offsets = [0, 0], sizes = [2, 32], strides = [1, 1]} : vector<2x128xf32> to vector<2x32xf32>
    %485 = arith.negf %484 : vector<2x32xf32>
    %486 = math.exp %485 : vector<2x32xf32>
    %cst_117 = arith.constant 1.000000e+00 : f32
    %487 = vector.broadcast %cst_117 : f32 to vector<2x32xf32>
    %488 = arith.addf %487, %486 : vector<2x32xf32>
    %489 = arith.divf %487, %488 : vector<2x32xf32>
    %490 = vector.extract_strided_slice %483 {offsets = [0, 32], sizes = [2, 32], strides = [1, 1]} : vector<2x128xf32> to vector<2x32xf32>
    %491 = arith.negf %490 : vector<2x32xf32>
    %492 = math.exp %491 : vector<2x32xf32>
    %cst_118 = arith.constant 1.000000e+00 : f32
    %493 = vector.broadcast %cst_118 : f32 to vector<2x32xf32>
    %494 = arith.addf %493, %492 : vector<2x32xf32>
    %495 = arith.divf %493, %494 : vector<2x32xf32>
    %496 = vector.extract_strided_slice %483 {offsets = [0, 64], sizes = [2, 32], strides = [1, 1]} : vector<2x128xf32> to vector<2x32xf32>
    %497 = math.tanh %496 : vector<2x32xf32>
    %498 = vector.extract_strided_slice %483 {offsets = [0, 96], sizes = [2, 32], strides = [1, 1]} : vector<2x128xf32> to vector<2x32xf32>
    %499 = arith.negf %498 : vector<2x32xf32>
    %500 = math.exp %499 : vector<2x32xf32>
    %cst_119 = arith.constant 1.000000e+00 : f32
    %501 = vector.broadcast %cst_119 : f32 to vector<2x32xf32>
    %502 = arith.addf %501, %500 : vector<2x32xf32>
    %503 = arith.divf %501, %502 : vector<2x32xf32>
    %504 = arith.mulf %495, %476 : vector<2x32xf32>
    %505 = arith.mulf %489, %497 : vector<2x32xf32>
    %506 = arith.addf %504, %505 : vector<2x32xf32>
    %507 = math.tanh %506 : vector<2x32xf32>
    %508 = arith.mulf %503, %507 : vector<2x32xf32>
    %c14_120 = arith.constant 14 : index
    %c0_121 = arith.constant 0 : index
    %509 = vector.load %arg14[%c14_120, %c0_121] : memref<16x32xf32, #tpu.memory_space<vmem>>, vector<2x32xf32>
    tpu.vector_store %arg14[%c14_120, %c0_121], %508 {strides = array<i32>} : memref<16x32xf32, #tpu.memory_space<vmem>>, vector<2x32xf32>,
    %c1_122 = arith.constant 1 : index
    %c0_123 = arith.constant 0 : index
    %c0_124 = arith.constant 0 : index
    %510 = vector.load %arg12[%c1_122, %c0_123, %c0_124] : memref<2x2x32xf32, #tpu.memory_space<vmem>>, vector<1x2x32xf32>
    %511 = vector.shape_cast %510 : vector<1x2x32xf32> to vector<2x32xf32>
    %512 = vector.shape_cast %508 : vector<2x32xf32> to vector<1x2x32xf32>
    tpu.vector_store %arg12[%c1_122, %c0_123, %c0_124], %512 {strides = array<i32>} : memref<2x2x32xf32, #tpu.memory_space<vmem>>, vector<1x2x32xf32>,
    %c1_125 = arith.constant 1 : index
    %c0_126 = arith.constant 0 : index
    %c0_127 = arith.constant 0 : index
    %513 = vector.load %arg13[%c1_125, %c0_126, %c0_127] : memref<2x2x32xf32, #tpu.memory_space<vmem>>, vector<1x2x32xf32>
    %514 = vector.shape_cast %513 : vector<1x2x32xf32> to vector<2x32xf32>
    %515 = vector.shape_cast %506 : vector<2x32xf32> to vector<1x2x32xf32>
    tpu.vector_store %arg13[%c1_125, %c0_126, %c0_127], %515 {strides = array<i32>} : memref<2x2x32xf32, #tpu.memory_space<vmem>>, vector<1x2x32xf32>,
    %c0_128 = arith.constant 0 : index
    %c0_129 = arith.constant 0 : index
    %516 = vector.load %arg14[%c0_128, %c0_129] : memref<16x32xf32, #tpu.memory_space<vmem>>, vector<16x32xf32>
    %517 = arith.truncf %516 : vector<16x32xf32> to vector<16x32xbf16>
    %c0_130 = arith.constant 0 : index
    %c0_131 = arith.constant 0 : index
    %518 = vector.load %arg9[%c0_130, %c0_131] : memref<32x8xbf16, #tpu.memory_space<vmem>>, vector<32x8xbf16>
    %cst_132 = arith.constant dense<0.000000e+00> : vector<16x8xf32>
    %519 = tpu.matmul %517, %518, %cst_132 {dimension_numbers = #tpu.dot_dimension_numbers<[1], [0], [0], [1], [0, 0, 1, 1], [], []>} : vector<16x32xbf16>, vector<32x8xbf16>, vector<16x8xf32> -> vector<16x8xf32>
    %c0_133 = arith.constant 0 : index
    %c0_134 = arith.constant 0 : index
    %520 = vector.load %arg10[%c0_133, %c0_134] : memref<1x8xf32, #tpu.memory_space<vmem>>, vector<1x8xf32>
    %521 = vector.broadcast %520 : vector<1x8xf32> to vector<16x8xf32>
    %522 = arith.addf %519, %521 : vector<16x8xf32>
    %c0_135 = arith.constant 0 : index
    %c0_136 = arith.constant 0 : index
    %523 = vector.load %arg11[%c0_135, %c0_136] : memref<16x8xf32, #tpu.memory_space<vmem>>, vector<16x8xf32>
    tpu.vector_store %arg11[%c0_135, %c0_136], %522 {strides = array<i32>} : memref<16x8xf32, #tpu.memory_space<vmem>>, vector<16x8xf32>,
    return
  }
}

</mosaic_0001>

<llo_original>
// kernel: tpu_custom_call.1
$region0: #{tpu_custom_call.1}
  #allocation0 [shape = 'u32[]', space=smem, size = 0x4, offset = 0x4, fixed_abs, tag = 'smem constant byte address 0x4 - core index']
  #allocation1 [shape = 'u32[144,128]{1,0:T(1,128)}', space=vmem, size = 0x12000, scoped, tag = 'internal scratch']
  #allocation2 [shape = 'f32[16,32]{1,0:T(8,128)}', space=vmem, size = 0x2000, scoped, tag = 'scratch operand']
  %s0 = inlined_call_operand.vmem [shape: f32[16,16], index: 0, kind: input, shape index: {}]
  %s1 = inlined_call_operand.hbm [shape: f32[2,2,32], index: 1, kind: input, shape index: {}]
  %s2 = inlined_call_operand.hbm [shape: f32[2,2,32], index: 2, kind: input, shape index: {}]
  %s3 = inlined_call_operand.hbm [shape: bf16[16,128], index: 3, kind: input, shape index: {}]
  %s4 = inlined_call_operand.vmem [shape: bf16[32,128], index: 4, kind: input, shape index: {}]
  %s5 = inlined_call_operand.vmem [shape: f32[1,128], index: 5, kind: input, shape index: {}]
  %s6 = inlined_call_operand.hbm [shape: bf16[32,128], index: 6, kind: input, shape index: {}]
  %s7 = inlined_call_operand.hbm [shape: bf16[32,128], index: 7, kind: input, shape index: {}]
  %s8 = inlined_call_operand.vmem [shape: f32[1,128], index: 8, kind: input, shape index: {}]
  %s9 = inlined_call_operand.vmem [shape: bf16[32,8], index: 9, kind: input, shape index: {}]
  %s10 = inlined_call_operand.vmem [shape: f32[1,8], index: 10, kind: input, shape index: {}]
  %s11 = inlined_call_operand.vmem [shape: f32[16,8], index: 11, kind: output, shape index: {0}]
  %s12 = inlined_call_operand.hbm [shape: f32[2,2,32], index: 12, kind: output, shape index: {1}]
  %s13 = inlined_call_operand.hbm [shape: f32[2,2,32], index: 13, kind: output, shape index: {2}]
  %14 = xla_tuple %s11, %s12, %s13
  %s15 = sld [smem:[#allocation0]]
  $region90: #{tpu_custom_call.1} parent=0
    _
  %s17 = ssub.s32 1, %s15
  %s18 = scalar_select 0, %s17, %s15
  $region1: #{tpu_custom_call.1} parent=0
    #allocation3 [shape = 'u8[2048]{0}', space=vmem, size = 0x800, scoped, tag = 'input window, operand 1, single buffered']
    #allocation4 [shape = 's32[1]{0}', space=sflag, size = 0x4, scoped, tag = 'scoped memory for tpu_custom_call.1']
    #allocation5 [shape = 's32[1]{0}', space=sflag, size = 0x4, scoped, tag = 'scoped memory for tpu_custom_call.1']
    #allocation6 [shape = 'u8[2048]{0}', space=vmem, size = 0x800, scoped, tag = 'input window, operand 2, single buffered']
    #allocation7 [shape = 's32[1]{0}', space=sflag, size = 0x4, scoped, tag = 'scoped memory for tpu_custom_call.1']
    #allocation8 [shape = 'u8[4096]{0}', space=vmem, size = 0x1000, scoped, tag = 'input window, operand 3, single buffered']
    #allocation9 [shape = 'u8[8192]{0}', space=vmem, size = 0x2000, scoped, tag = 'input window, operand 6, single buffered']
    #allocation10 [shape = 's32[1]{0}', space=sflag, size = 0x4, scoped, tag = 'scoped memory for tpu_custom_call.1']
    #allocation11 [shape = 'u8[8192]{0}', space=vmem, size = 0x2000, scoped, tag = 'input window, operand 7, single buffered']
    #allocation12 [shape = 'u8[2048]{0}', space=vmem, size = 0x800, scoped, tag = 'output window, operand 1, single buffered']
    #allocation13 [shape = 'u8[2048]{0}', space=vmem, size = 0x800, scoped, tag = 'output window, operand 2, single buffered']
    #allocation14 [shape = 's32[1]{0}', space=sflag, size = 0x4, scoped, tag = 'scoped memory for tpu_custom_call.1']
    %19 = vsyncpa [#allocation4], 0
    %20 = vsyncpa [#allocation7], 0
    %21 = vsyncpa [#allocation10], 0
    %22 = vsyncpa [#allocation5], 0
    %23 = vsyncpa [#allocation14], 0
    // Predicated region
    $region2: #{tpu_custom_call.1} parent=1 // pred_check
      _
    $region3: #{tpu_custom_call.1} parent=1 // pred_check_branch
      %25 = sbr.rel (0) target = $region5
    $region4: #{tpu_custom_call.1} parent=1 // pred_region
      _
    $region5: #{tpu_custom_call.1} parent=1 // pred_fallthru
      _
    // Predicated region
    $region6: #{tpu_custom_call.1} parent=1 // pred_check
      _
    $region7: #{tpu_custom_call.1} parent=1 // pred_check_branch
      %27 = sbr.rel (0) target = $region9
    $region8: #{tpu_custom_call.1} parent=1 // pred_region
      %s29 = ssub.s32 64, 64
      %30 = vsyncadd [#allocation4], %s29
      %s31 = sshll.u32 [#allocation3], 4
      %s32 = int_to_ptr.vmem [resolvable:$true] %s31
      %37 = dma.hbm_to_vmem [thread:$0]  %s1, 64, %s32, [#allocation4], 32, 32, 2
    $region9: #{tpu_custom_call.1} parent=1 // pred_fallthru
      _
    // Predicated region
    $region10: #{tpu_custom_call.1} parent=1 // pred_check
      _
    $region11: #{tpu_custom_call.1} parent=1 // pred_check_branch
      %39 = sbr.rel (0) target = $region13
    $region12: #{tpu_custom_call.1} parent=1 // pred_region
      %s41 = ssub.s32 64, 64
      %42 = vsyncadd [#allocation7], %s41
      %s43 = sshll.u32 [#allocation6], 4
      %s44 = int_to_ptr.vmem [resolvable:$true] %s43
      %49 = dma.hbm_to_vmem [thread:$0]  %s2, 64, %s44, [#allocation7], 32, 32, 2
    $region13: #{tpu_custom_call.1} parent=1 // pred_fallthru
      _
    // Predicated region
    $region14: #{tpu_custom_call.1} parent=1 // pred_check
      _
    $region15: #{tpu_custom_call.1} parent=1 // pred_check_branch
      %51 = sbr.rel (0) target = $region17
    $region16: #{tpu_custom_call.1} parent=1 // pred_region
      %s53 = ssub.s32 128, 128
      %54 = vsyncadd [#allocation7], %s53
      %s55 = sshll.u32 [#allocation8], 4
      %s56 = int_to_ptr.vmem [resolvable:$true] %s55
      %61 = dma.hbm_to_vmem [thread:$0]  %s3, 128, %s56, [#allocation7], 64, 64, 4
    $region17: #{tpu_custom_call.1} parent=1 // pred_fallthru
      _
    // Predicated region
    $region18: #{tpu_custom_call.1} parent=1 // pred_check
      _
    $region19: #{tpu_custom_call.1} parent=1 // pred_check_branch
      %63 = sbr.rel (0) target = $region21
    $region20: #{tpu_custom_call.1} parent=1 // pred_region
      _
    $region21: #{tpu_custom_call.1} parent=1 // pred_fallthru
      _
    // Predicated region
    $region22: #{tpu_custom_call.1} parent=1 // pred_check
      _
    $region23: #{tpu_custom_call.1} parent=1 // pred_check_branch
      %65 = sbr.rel (0) target = $region25
    $region24: #{tpu_custom_call.1} parent=1 // pred_region
      _
    $region25: #{tpu_custom_call.1} parent=1 // pred_fallthru
      _
    // Predicated region
    $region26: #{tpu_custom_call.1} parent=1 // pred_check
      _
    $region27: #{tpu_custom_call.1} parent=1 // pred_check_branch
      %67 = sbr.rel (0) target = $region29
    $region28: #{tpu_custom_call.1} parent=1 // pred_region
      %s69 = ssub.s32 256, 256
      %70 = vsyncadd [#allocation10], %s69
      %s71 = sshll.u32 [#allocation9], 4
      %s72 = int_to_ptr.vmem [resolvable:$true] %s71
      %77 = dma.hbm_to_vmem [thread:$0]  %s6, 256, %s72, [#allocation10], 64, 64, 4
    $region29: #{tpu_custom_call.1} parent=1 // pred_fallthru
      _
    // Predicated region
    $region30: #{tpu_custom_call.1} parent=1 // pred_check
      _
    $region31: #{tpu_custom_call.1} parent=1 // pred_check_branch
      %79 = sbr.rel (0) target = $region33
    $region32: #{tpu_custom_call.1} parent=1 // pred_region
      %s81 = ssub.s32 256, 256
      %82 = vsyncadd [#allocation10], %s81
      %s83 = sshll.u32 [#allocation11], 4
      %s84 = int_to_ptr.vmem [resolvable:$true] %s83
      %89 = dma.hbm_to_vmem [thread:$0]  %s7, 256, %s84, [#allocation10], 64, 64, 4
    $region33: #{tpu_custom_call.1} parent=1 // pred_fallthru
      _
    // Predicated region
    $region34: #{tpu_custom_call.1} parent=1 // pred_check
      _
    $region35: #{tpu_custom_call.1} parent=1 // pred_check_branch
      %91 = sbr.rel (0) target = $region37
    $region36: #{tpu_custom_call.1} parent=1 // pred_region
      _
    $region37: #{tpu_custom_call.1} parent=1 // pred_fallthru
      _
    // Predicated region
    $region38: #{tpu_custom_call.1} parent=1 // pred_check
      _
    $region39: #{tpu_custom_call.1} parent=1 // pred_check_branch
      %93 = sbr.rel (0) target = $region41
    $region40: #{tpu_custom_call.1} parent=1 // pred_region
      _
    $region41: #{tpu_custom_call.1} parent=1 // pred_fallthru
      _
    // Predicated region
    $region42: #{tpu_custom_call.1} parent=1 // pred_check
      _
    $region43: #{tpu_custom_call.1} parent=1 // pred_check_branch
      %95 = sbr.rel (0) target = $region45
    $region44: #{tpu_custom_call.1} parent=1 // pred_region
      _
    $region45: #{tpu_custom_call.1} parent=1 // pred_fallthru
      _
    // Predicated region
    $region46: #{tpu_custom_call.1} parent=1 // pred_check
      _
    $region47: #{tpu_custom_call.1} parent=1 // pred_check_branch
      %97 = sbr.rel (0) target = $region49
    $region48: #{tpu_custom_call.1} parent=1 // pred_region
      %98 = dma.done [#allocation4], 64
    $region49: #{tpu_custom_call.1} parent=1 // pred_fallthru
      _
    // Predicated region
    $region50: #{tpu_custom_call.1} parent=1 // pred_check
      _
    $region51: #{tpu_custom_call.1} parent=1 // pred_check_branch
      %100 = sbr.rel (0) target = $region53
    $region52: #{tpu_custom_call.1} parent=1 // pred_region
      %101 = dma.done [#allocation7], 64
    $region53: #{tpu_custom_call.1} parent=1 // pred_fallthru
      _
    // Predicated region
    $region54: #{tpu_custom_call.1} parent=1 // pred_check
      _
    $region55: #{tpu_custom_call.1} parent=1 // pred_check_branch
      %103 = sbr.rel (0) target = $region57
    $region56: #{tpu_custom_call.1} parent=1 // pred_region
      %104 = dma.done [#allocation7], 128
    $region57: #{tpu_custom_call.1} parent=1 // pred_fallthru
      _
    // Predicated region
    $region58: #{tpu_custom_call.1} parent=1 // pred_check
      _
    $region59: #{tpu_custom_call.1} parent=1 // pred_check_branch
      %106 = sbr.rel (0) target = $region61
    $region60: #{tpu_custom_call.1} parent=1 // pred_region
      %107 = dma.done [#allocation10], 256
    $region61: #{tpu_custom_call.1} parent=1 // pred_fallthru
      _
    // Predicated region
    $region62: #{tpu_custom_call.1} parent=1 // pred_check
      _
    $region63: #{tpu_custom_call.1} parent=1 // pred_check_branch
      %109 = sbr.rel (0) target = $region65
    $region64: #{tpu_custom_call.1} parent=1 // pred_region
      %110 = dma.done [#allocation10], 256
    $region65: #{tpu_custom_call.1} parent=1 // pred_fallthru
      _
    %v112 = vld [vmem:[%s0] sm:$0xff]
    %v113 = vld [vmem:[%s0 + $0x8] sm:$0xff]
    %v114 = vld [vmem:[#allocation8] sm:$0xf]
    %v115 = vld [vmem:[#allocation8 + $0x4] sm:$0xf]
    %v116 = vld [vmem:[%s4] sm:$0xf]
    %v117 = vld [vmem:[%s4 + $0x4] sm:$0xf]
    %v118 = vld [vmem:[%s4 + $0x8] sm:$0xf]
    %v119 = vld [vmem:[%s4 + $0xc] sm:$0xf]
    %v120 = vld [vmem:[%s5] sm:$0x1]
    %v121 = vpack.c.bf16 %v113, %v112
    %v123 = vlaneseq
    %v124 = vshrl.u32 %v123, 7
    %v125 = vsub.s32 0, %v124
    %v126 = vrot.slane %v120, %v125
    %v130 = vunpack.c.l.b16 %v114
    %v131 = vunpack.c.l.b16 %v115
    %v132 = vpack.c.b16 %v131, %v130
    %vm134 = vcmask 130048
    %v136 = vsel %vm134, %v121, 0
    %138 = vmatprep.subr.bf16.mxu0 0
    %139 = vmatpush1.bf16.msra.mxu0 %v132
    %140 = vmatprep.subr.bf16.mxu0 0
    %141 = vmatpush1.bf16.msra.mxu0 0
    %142 = vmatprep.subr.bf16.mxu0 0
    %143 = vmatpush1.bf16.msra.mxu0 0
    %144 = vmatprep.subr.bf16.mxu0 0
    %145 = vmatpush1.bf16.msra.mxu0 0
    %146 = vmatprep.subr.bf16.mxu0 0
    %147 = vmatpush1.bf16.msra.mxu0 0
    %148 = vmatprep.subr.bf16.mxu0 0
    %149 = vmatpush1.bf16.msra.mxu0 0
    %150 = vmatprep.subr.bf16.mxu0 0
    %151 = vmatpush1.bf16.msra.mxu0 0
    %152 = vmatprep.subr.bf16.mxu0 0
    %153 = vmatpush1.bf16.msra.mxu0 0
    %154 = vmatprep.subr.bf16.mxu0 0
    %155 = vmatpush1.bf16.msra.mxu0 0
    %156 = vmatprep.subr.bf16.mxu0 0
    %157 = vmatpush1.bf16.msra.mxu0 0
    %158 = vmatprep.subr.bf16.mxu0 0
    %159 = vmatpush1.bf16.msra.mxu0 0
    %160 = vmatprep.subr.bf16.mxu0 0
    %161 = vmatpush1.bf16.msra.mxu0 0
    %162 = vmatprep.subr.bf16.mxu0 0
    %163 = vmatpush1.bf16.msra.mxu0 0
    %164 = vmatprep.subr.bf16.mxu0 0
    %165 = vmatpush1.bf16.msra.mxu0 0
    %166 = vmatprep.subr.bf16.mxu0 0
    %167 = vmatpush1.bf16.msra.mxu0 0
    %168 = vmatprep.subr.bf16.mxu0 0
    %169 = vmatpush1.bf16.msra.mxu0 0
    %170 = vmatprep.mubr.bf16.mxu0 0
    %171 = vmatmul.mubr.bf16.gmra.mrb[0].mxu0 %v136
    %v172 = vpop.f32.mrb[0].mxu0
    %v173 = vadd.f32 %v126, %v172
    %v174 = vpop.f32.mrb[0].mxu0
    %v175 = vpop.f32.mrb[0].mxu0
    %v176 = vadd.f32 %v126, %v175
    %v177 = vpop.f32.mrb[0].mxu0
    %178 = vdwg.mxu0
    %v179 = vld [vmem:[#allocation3] sm:$0x3]
    %v180 = vld [vmem:[#allocation6] sm:$0x3]
    %v181 = vpack.c.bf16 %v179, %v179
    %v186 = vunpack.c.l.b16 %v116
    %v187 = vunpack.c.l.b16 %v117
    %v188 = vunpack.c.l.b16 %v118
    %v189 = vunpack.c.l.b16 %v119
    %v190 = vpack.c.b16 %v187, %v186
    %v191 = vpack.c.b16 %v189, %v188
    %vm194 = vcmask 261120
    %v196 = vsel %vm194, %v181, 0
    %198 = vmatprep.subr.bf16.mxu0 0
    %199 = vmatpush1.bf16.msra.mxu0 %v190
    %200 = vmatprep.subr.bf16.mxu0 0
    %201 = vmatpush1.bf16.msra.mxu0 %v191
    %202 = vmatprep.subr.bf16.mxu0 0
    %203 = vmatpush1.bf16.msra.mxu0 0
    %204 = vmatprep.subr.bf16.mxu0 0
    %205 = vmatpush1.bf16.msra.mxu0 0
    %206 = vmatprep.subr.bf16.mxu0 0
    %207 = vmatpush1.bf16.msra.mxu0 0
    %208 = vmatprep.subr.bf16.mxu0 0
    %209 = vmatpush1.bf16.msra.mxu0 0
    %210 = vmatprep.subr.bf16.mxu0 0
    %211 = vmatpush1.bf16.msra.mxu0 0
    %212 = vmatprep.subr.bf16.mxu0 0
    %213 = vmatpush1.bf16.msra.mxu0 0
    %214 = vmatprep.subr.bf16.mxu0 0
    %215 = vmatpush1.bf16.msra.mxu0 0
    %216 = vmatprep.subr.bf16.mxu0 0
    %217 = vmatpush1.bf16.msra.mxu0 0
    %218 = vmatprep.subr.bf16.mxu0 0
    %219 = vmatpush1.bf16.msra.mxu0 0
    %220 = vmatprep.subr.bf16.mxu0 0
    %221 = vmatpush1.bf16.msra.mxu0 0
    %222 = vmatprep.subr.bf16.mxu0 0
    %223 = vmatpush1.bf16.msra.mxu0 0
    %224 = vmatprep.subr.bf16.mxu0 0
    %225 = vmatpush1.bf16.msra.mxu0 0
    %226 = vmatprep.subr.bf16.mxu0 0
    %227 = vmatpush1.bf16.msra.mxu0 0
    %228 = vmatprep.subr.bf16.mxu0 0
    %229 = vmatpush1.bf16.msra.mxu0 0
    %230 = vmatprep.mubr.bf16.mxu0 0
    %231 = vmatmul.mubr.bf16.gmra.mrb[0].mxu0 %v196
    %v232 = vpop.f32.mrb[0].mxu0
    %v233 = vadd.f32 0.0, %v232
    %v234 = vpop.f32.mrb[0].mxu0
    %v235 = vpop.f32.mrb[0].mxu0
    %v236 = vpop.f32.mrb[0].mxu0
    %237 = vdwg.mxu0
    %v238 = vadd.f32 %v173, %v233
    %v239 = vxor.u32 %v238, 2147483648
    %v240 = vmul.f32 %v239, 1.442695
    %v241 = vpow.pop %v240
    %v242 = vadd.f32 %v241, 1.0
    %v243 = vrcp.pop %v242
    %v244 = vmul.f32 1.0, %v243
    %v245 = vtanh.pop %v238
    %247 = vrot.lane.b32.xlu0 %v180, 32
    %v248 = vpop.permute.xlu0 %247
    %v250 = vmul.f32 %v244, %v248
    %252 = vrot.lane.b32.xlu0 %v245, 64
    %v253 = vpop.permute.xlu0 %252
    %v255 = vmul.f32 %v244, %v253
    %257 = vrot.lane.b32.xlu0 %v255, 32
    %v258 = vpop.permute.xlu0 %257
    %v260 = vadd.f32 %v250, %v258
    %v261 = vtanh.pop %v260
    %263 = vrot.lane.b32.xlu0 %v261, 64
    %v264 = vpop.permute.xlu0 %263
    %v266 = vmul.f32 %v244, %v264
    %268 = vrot.lane.b32.xlu0 %v266, 32
    %v269 = vpop.permute.xlu0 %268
    %vm271 = vcmask 254976
    %272 = vst.msk [vmem:[#allocation2] sm:$0x3] %vm271, %v269
    %v273 = vpack.c.bf16 %v266, %v266
    %275 = vrot.lane.b32.xlu0 %v273, 32
    %v276 = vpop.permute.xlu0 %275
    %v278 = vsel %vm194, %v276, 0
    %280 = vmatprep.subr.bf16.mxu0 0
    %281 = vmatpush1.bf16.msra.mxu0 %v190
    %282 = vmatprep.subr.bf16.mxu0 0
    %283 = vmatpush1.bf16.msra.mxu0 %v191
    %284 = vmatprep.subr.bf16.mxu0 0
    %285 = vmatpush1.bf16.msra.mxu0 0
    %286 = vmatprep.subr.bf16.mxu0 0
    %287 = vmatpush1.bf16.msra.mxu0 0
    %288 = vmatprep.subr.bf16.mxu0 0
    %289 = vmatpush1.bf16.msra.mxu0 0
    %290 = vmatprep.subr.bf16.mxu0 0
    %291 = vmatpush1.bf16.msra.mxu0 0
    %292 = vmatprep.subr.bf16.mxu0 0
    %293 = vmatpush1.bf16.msra.mxu0 0
    %294 = vmatprep.subr.bf16.mxu0 0
    %295 = vmatpush1.bf16.msra.mxu0 0
    %296 = vmatprep.subr.bf16.mxu0 0
    %297 = vmatpush1.bf16.msra.mxu0 0
    %298 = vmatprep.subr.bf16.mxu0 0
    %299 = vmatpush1.bf16.msra.mxu0 0
    %300 = vmatprep.subr.bf16.mxu0 0
    %301 = vmatpush1.bf16.msra.mxu0 0
    %302 = vmatprep.subr.bf16.mxu0 0
    %303 = vmatpush1.bf16.msra.mxu0 0
    %304 = vmatprep.subr.bf16.mxu0 0
    %305 = vmatpush1.bf16.msra.mxu0 0
    %306 = vmatprep.subr.bf16.mxu0 0
    %307 = vmatpush1.bf16.msra.mxu0 0
    %308 = vmatprep.subr.bf16.mxu0 0
    %309 = vmatpush1.bf16.msra.mxu0 0
    %310 = vmatprep.subr.bf16.mxu0 0
    %311 = vmatpush1.bf16.msra.mxu0 0
    %312 = vmatprep.mubr.bf16.mxu0 0
    %313 = vmatmul.mubr.bf16.gmra.mrb[0].mxu0 %v278
    %v314 = vpop.f32.mrb[0].mxu0
    %v315 = vadd.f32 0.0, %v314
    %v316 = vpop.f32.mrb[0].mxu0
    %v317 = vpop.f32.mrb[0].mxu0
    %v318 = vpop.f32.mrb[0].mxu0
    %319 = vdwg.mxu0
    %v321 = vrot.slane %v315, 6
    %v323 = vadd.f32 %v173, %v321
    %v324 = vxor.u32 %v323, 2147483648
    %v325 = vmul.f32 %v324, 1.442695
    %v326 = vpow.pop %v325
    %v327 = vadd.f32 %v326, 1.0
    %v328 = vrcp.pop %v327
    %v329 = vmul.f32 1.0, %v328
    %v330 = vtanh.pop %v323
    %v332 = vrot.slane %v260, 6
    %v334 = vmul.f32 %v329, %v332
    %336 = vrot.lane.b32.xlu0 %v330, 64
    %v337 = vpop.permute.xlu0 %336
    %v339 = vmul.f32 %v329, %v337
    %341 = vrot.lane.b32.xlu0 %v339, 32
    %v342 = vpop.permute.xlu0 %341
    %v344 = vadd.f32 %v334, %v342
    %v345 = vtanh.pop %v344
    %347 = vrot.lane.b32.xlu0 %v345, 64
    %v348 = vpop.permute.xlu0 %347
    %v350 = vmul.f32 %v329, %v348
    %352 = vrot.lane.b32.xlu0 %v350, 32
    %v353 = vpop.permute.xlu0 %352
    %vm355 = vcmask 257026
    %356 = vst.msk [vmem:[#allocation2] sm:$0xc] %vm355, %v353
    %v357 = vpack.c.bf16 %v350, %v350
    %v359 = vrot.slane %v357, 1
    %360 = vrot.lane.b32.xlu0 %v359, 32
    %v361 = vpop.permute.xlu0 %360
    %v363 = vsel %vm194, %v361, 0
    %365 = vmatprep.subr.bf16.mxu0 0
    %366 = vmatpush1.bf16.msra.mxu0 %v190
    %367 = vmatprep.subr.bf16.mxu0 0
    %368 = vmatpush1.bf16.msra.mxu0 %v191
    %369 = vmatprep.subr.bf16.mxu0 0
    %370 = vmatpush1.bf16.msra.mxu0 0
    %371 = vmatprep.subr.bf16.mxu0 0
    %372 = vmatpush1.bf16.msra.mxu0 0
    %373 = vmatprep.subr.bf16.mxu0 0
    %374 = vmatpush1.bf16.msra.mxu0 0
    %375 = vmatprep.subr.bf16.mxu0 0
    %376 = vmatpush1.bf16.msra.mxu0 0
    %377 = vmatprep.subr.bf16.mxu0 0
    %378 = vmatpush1.bf16.msra.mxu0 0
    %379 = vmatprep.subr.bf16.mxu0 0
    %380 = vmatpush1.bf16.msra.mxu0 0
    %381 = vmatprep.subr.bf16.mxu0 0
    %382 = vmatpush1.bf16.msra.mxu0 0
    %383 = vmatprep.subr.bf16.mxu0 0
    %384 = vmatpush1.bf16.msra.mxu0 0
    %385 = vmatprep.subr.bf16.mxu0 0
    %386 = vmatpush1.bf16.msra.mxu0 0
    %387 = vmatprep.subr.bf16.mxu0 0
    %388 = vmatpush1.bf16.msra.mxu0 0
    %389 = vmatprep.subr.bf16.mxu0 0
    %390 = vmatpush1.bf16.msra.mxu0 0
    %391 = vmatprep.subr.bf16.mxu0 0
    %392 = vmatpush1.bf16.msra.mxu0 0
    %393 = vmatprep.subr.bf16.mxu0 0
    %394 = vmatpush1.bf16.msra.mxu0 0
    %395 = vmatprep.subr.bf16.mxu0 0
    %396 = vmatpush1.bf16.msra.mxu0 0
    %397 = vmatprep.mubr.bf16.mxu0 0
    %398 = vmatmul.mubr.bf16.gmra.mrb[0].mxu0 %v363
    %v399 = vpop.f32.mrb[0].mxu0
    %v400 = vadd.f32 0.0, %v399
    %v401 = vpop.f32.mrb[0].mxu0
    %v402 = vpop.f32.mrb[0].mxu0
    %v403 = vpop.f32.mrb[0].mxu0
    %404 = vdwg.mxu0
    %v406 = vrot.slane %v400, 4
    %v408 = vadd.f32 %v173, %v406
    %v409 = vxor.u32 %v408, 2147483648
    %v410 = vmul.f32 %v409, 1.442695
    %v411 = vpow.pop %v410
    %v412 = vadd.f32 %v411, 1.0
    %v413 = vrcp.pop %v412
    %v414 = vmul.f32 1.0, %v413
    %v415 = vtanh.pop %v408
    %v417 = vrot.slane %v344, 6
    %v419 = vmul.f32 %v414, %v417
    %421 = vrot.lane.b32.xlu0 %v415, 64
    %v422 = vpop.permute.xlu0 %421
    %v424 = vmul.f32 %v414, %v422
    %426 = vrot.lane.b32.xlu0 %v424, 32
    %v427 = vpop.permute.xlu0 %426
    %v429 = vadd.f32 %v419, %v427
    %v430 = vtanh.pop %v429
    %432 = vrot.lane.b32.xlu0 %v430, 64
    %v433 = vpop.permute.xlu0 %432
    %v435 = vmul.f32 %v414, %v433
    %437 = vrot.lane.b32.xlu0 %v435, 32
    %v438 = vpop.permute.xlu0 %437
    %vm440 = vcmask 259076
    %441 = vst.msk [vmem:[#allocation2] sm:$0x30] %vm440, %v438
    %v442 = vpack.c.bf16 %v435, %v435
    %v444 = vrot.slane %v442, 2
    %445 = vrot.lane.b32.xlu0 %v444, 32
    %v446 = vpop.permute.xlu0 %445
    %v448 = vsel %vm194, %v446, 0
    %450 = vmatprep.subr.bf16.mxu0 0
    %451 = vmatpush1.bf16.msra.mxu0 %v190
    %452 = vmatprep.subr.bf16.mxu0 0
    %453 = vmatpush1.bf16.msra.mxu0 %v191
    %454 = vmatprep.subr.bf16.mxu0 0
    %455 = vmatpush1.bf16.msra.mxu0 0
    %456 = vmatprep.subr.bf16.mxu0 0
    %457 = vmatpush1.bf16.msra.mxu0 0
    %458 = vmatprep.subr.bf16.mxu0 0
    %459 = vmatpush1.bf16.msra.mxu0 0
    %460 = vmatprep.subr.bf16.mxu0 0
    %461 = vmatpush1.bf16.msra.mxu0 0
    %462 = vmatprep.subr.bf16.mxu0 0
    %463 = vmatpush1.bf16.msra.mxu0 0
    %464 = vmatprep.subr.bf16.mxu0 0
    %465 = vmatpush1.bf16.msra.mxu0 0
    %466 = vmatprep.subr.bf16.mxu0 0
    %467 = vmatpush1.bf16.msra.mxu0 0
    %468 = vmatprep.subr.bf16.mxu0 0
    %469 = vmatpush1.bf16.msra.mxu0 0
    %470 = vmatprep.subr.bf16.mxu0 0
    %471 = vmatpush1.bf16.msra.mxu0 0
    %472 = vmatprep.subr.bf16.mxu0 0
    %473 = vmatpush1.bf16.msra.mxu0 0
    %474 = vmatprep.subr.bf16.mxu0 0
    %475 = vmatpush1.bf16.msra.mxu0 0
    %476 = vmatprep.subr.bf16.mxu0 0
    %477 = vmatpush1.bf16.msra.mxu0 0
    %478 = vmatprep.subr.bf16.mxu0 0
    %479 = vmatpush1.bf16.msra.mxu0 0
    %480 = vmatprep.subr.bf16.mxu0 0
    %481 = vmatpush1.bf16.msra.mxu0 0
    %482 = vmatprep.mubr.bf16.mxu0 0
    %483 = vmatmul.mubr.bf16.gmra.mrb[0].mxu0 %v448
    %v484 = vpop.f32.mrb[0].mxu0
    %v485 = vadd.f32 0.0, %v484
    %v486 = vpop.f32.mrb[0].mxu0
    %v487 = vpop.f32.mrb[0].mxu0
    %v488 = vpop.f32.mrb[0].mxu0
    %489 = vdwg.mxu0
    %v491 = vrot.slane %v485, 2
    %v493 = vadd.f32 %v173, %v491
    %v494 = vxor.u32 %v493, 2147483648
    %v495 = vmul.f32 %v494, 1.442695
    %v496 = vpow.pop %v495
    %v497 = vadd.f32 %v496, 1.0
    %v498 = vrcp.pop %v497
    %v499 = vmul.f32 1.0, %v498
    %v500 = vtanh.pop %v493
    %v502 = vrot.slane %v429, 6
    %v504 = vmul.f32 %v499, %v502
    %506 = vrot.lane.b32.xlu0 %v500, 64
    %v507 = vpop.permute.xlu0 %506
    %v509 = vmul.f32 %v499, %v507
    %511 = vrot.lane.b32.xlu0 %v509, 32
    %v512 = vpop.permute.xlu0 %511
    %v514 = vadd.f32 %v504, %v512
    %v515 = vtanh.pop %v514
    %517 = vrot.lane.b32.xlu0 %v515, 64
    %v518 = vpop.permute.xlu0 %517
    %v520 = vmul.f32 %v499, %v518
    %522 = vrot.lane.b32.xlu0 %v520, 32
    %v523 = vpop.permute.xlu0 %522
    %vm525 = vcmask 261126
    %526 = vst.msk [vmem:[#allocation2] sm:$0xc0] %vm525, %v523
    %v527 = vpack.c.bf16 %v520, %v520
    %v529 = vrot.slane %v527, 3
    %530 = vrot.lane.b32.xlu0 %v529, 32
    %v531 = vpop.permute.xlu0 %530
    %v533 = vsel %vm194, %v531, 0
    %535 = vmatprep.subr.bf16.mxu0 0
    %536 = vmatpush1.bf16.msra.mxu0 %v190
    %537 = vmatprep.subr.bf16.mxu0 0
    %538 = vmatpush1.bf16.msra.mxu0 %v191
    %539 = vmatprep.subr.bf16.mxu0 0
    %540 = vmatpush1.bf16.msra.mxu0 0
    %541 = vmatprep.subr.bf16.mxu0 0
    %542 = vmatpush1.bf16.msra.mxu0 0
    %543 = vmatprep.subr.bf16.mxu0 0
    %544 = vmatpush1.bf16.msra.mxu0 0
    %545 = vmatprep.subr.bf16.mxu0 0
    %546 = vmatpush1.bf16.msra.mxu0 0
    %547 = vmatprep.subr.bf16.mxu0 0
    %548 = vmatpush1.bf16.msra.mxu0 0
    %549 = vmatprep.subr.bf16.mxu0 0
    %550 = vmatpush1.bf16.msra.mxu0 0
    %551 = vmatprep.subr.bf16.mxu0 0
    %552 = vmatpush1.bf16.msra.mxu0 0
    %553 = vmatprep.subr.bf16.mxu0 0
    %554 = vmatpush1.bf16.msra.mxu0 0
    %555 = vmatprep.subr.bf16.mxu0 0
    %556 = vmatpush1.bf16.msra.mxu0 0
    %557 = vmatprep.subr.bf16.mxu0 0
    %558 = vmatpush1.bf16.msra.mxu0 0
    %559 = vmatprep.subr.bf16.mxu0 0
    %560 = vmatpush1.bf16.msra.mxu0 0
    %561 = vmatprep.subr.bf16.mxu0 0
    %562 = vmatpush1.bf16.msra.mxu0 0
    %563 = vmatprep.subr.bf16.mxu0 0
    %564 = vmatpush1.bf16.msra.mxu0 0
    %565 = vmatprep.subr.bf16.mxu0 0
    %566 = vmatpush1.bf16.msra.mxu0 0
    %567 = vmatprep.mubr.bf16.mxu0 0
    %568 = vmatmul.mubr.bf16.gmra.mrb[0].mxu0 %v533
    %v569 = vpop.f32.mrb[0].mxu0
    %v570 = vadd.f32 0.0, %v569
    %v571 = vpop.f32.mrb[0].mxu0
    %v572 = vpop.f32.mrb[0].mxu0
    %v573 = vpop.f32.mrb[0].mxu0
    %574 = vdwg.mxu0
    %v575 = vadd.f32 %v176, %v570
    %v576 = vxor.u32 %v575, 2147483648
    %v577 = vmul.f32 %v576, 1.442695
    %v578 = vpow.pop %v577
    %v579 = vadd.f32 %v578, 1.0
    %v580 = vrcp.pop %v579
    %v581 = vmul.f32 1.0, %v580
    %v582 = vtanh.pop %v575
    %v584 = vrot.slane %v514, 6
    %v586 = vmul.f32 %v581, %v584
    %588 = vrot.lane.b32.xlu0 %v582, 64
    %v589 = vpop.permute.xlu0 %588
    %v591 = vmul.f32 %v581, %v589
    %593 = vrot.lane.b32.xlu0 %v591, 32
    %v594 = vpop.permute.xlu0 %593
    %v596 = vadd.f32 %v586, %v594
    %v597 = vtanh.pop %v596
    %599 = vrot.lane.b32.xlu0 %v597, 64
    %v600 = vpop.permute.xlu0 %599
    %v602 = vmul.f32 %v581, %v600
    %604 = vrot.lane.b32.xlu0 %v602, 32
    %v605 = vpop.permute.xlu0 %604
    %607 = vst.msk [vmem:[#allocation2 + $0x8] sm:$0x3] %vm271, %v605
    %v608 = vpack.c.bf16 %v602, %v602
    %610 = vrot.lane.b32.xlu0 %v608, 32
    %v611 = vpop.permute.xlu0 %610
    %v613 = vsel %vm194, %v611, 0
    %615 = vmatprep.subr.bf16.mxu0 0
    %616 = vmatpush1.bf16.msra.mxu0 %v190
    %617 = vmatprep.subr.bf16.mxu0 0
    %618 = vmatpush1.bf16.msra.mxu0 %v191
    %619 = vmatprep.subr.bf16.mxu0 0
    %620 = vmatpush1.bf16.msra.mxu0 0
    %621 = vmatprep.subr.bf16.mxu0 0
    %622 = vmatpush1.bf16.msra.mxu0 0
    %623 = vmatprep.subr.bf16.mxu0 0
    %624 = vmatpush1.bf16.msra.mxu0 0
    %625 = vmatprep.subr.bf16.mxu0 0
    %626 = vmatpush1.bf16.msra.mxu0 0
    %627 = vmatprep.subr.bf16.mxu0 0
    %628 = vmatpush1.bf16.msra.mxu0 0
    %629 = vmatprep.subr.bf16.mxu0 0
    %630 = vmatpush1.bf16.msra.mxu0 0
    %631 = vmatprep.subr.bf16.mxu0 0
    %632 = vmatpush1.bf16.msra.mxu0 0
    %633 = vmatprep.subr.bf16.mxu0 0
    %634 = vmatpush1.bf16.msra.mxu0 0
    %635 = vmatprep.subr.bf16.mxu0 0
    %636 = vmatpush1.bf16.msra.mxu0 0
    %637 = vmatprep.subr.bf16.mxu0 0
    %638 = vmatpush1.bf16.msra.mxu0 0
    %639 = vmatprep.subr.bf16.mxu0 0
    %640 = vmatpush1.bf16.msra.mxu0 0
    %641 = vmatprep.subr.bf16.mxu0 0
    %642 = vmatpush1.bf16.msra.mxu0 0
    %643 = vmatprep.subr.bf16.mxu0 0
    %644 = vmatpush1.bf16.msra.mxu0 0
    %645 = vmatprep.subr.bf16.mxu0 0
    %646 = vmatpush1.bf16.msra.mxu0 0
    %647 = vmatprep.mubr.bf16.mxu0 0
    %648 = vmatmul.mubr.bf16.gmra.mrb[0].mxu0 %v613
    %v649 = vpop.f32.mrb[0].mxu0
    %v650 = vadd.f32 0.0, %v649
    %v651 = vpop.f32.mrb[0].mxu0
    %v652 = vpop.f32.mrb[0].mxu0
    %v653 = vpop.f32.mrb[0].mxu0
    %654 = vdwg.mxu0
    %v656 = vrot.slane %v650, 6
    %v658 = vadd.f32 %v176, %v656
    %v659 = vxor.u32 %v658, 2147483648
    %v660 = vmul.f32 %v659, 1.442695
    %v661 = vpow.pop %v660
    %v662 = vadd.f32 %v661, 1.0
    %v663 = vrcp.pop %v662
    %v664 = vmul.f32 1.0, %v663
    %v665 = vtanh.pop %v658
    %v667 = vrot.slane %v596, 6
    %v669 = vmul.f32 %v664, %v667
    %671 = vrot.lane.b32.xlu0 %v665, 64
    %v672 = vpop.permute.xlu0 %671
    %v674 = vmul.f32 %v664, %v672
    %676 = vrot.lane.b32.xlu0 %v674, 32
    %v677 = vpop.permute.xlu0 %676
    %v679 = vadd.f32 %v669, %v677
    %v680 = vtanh.pop %v679
    %682 = vrot.lane.b32.xlu0 %v680, 64
    %v683 = vpop.permute.xlu0 %682
    %v685 = vmul.f32 %v664, %v683
    %687 = vrot.lane.b32.xlu0 %v685, 32
    %v688 = vpop.permute.xlu0 %687
    %690 = vst.msk [vmem:[#allocation2 + $0x8] sm:$0xc] %vm355, %v688
    %v691 = vpack.c.bf16 %v685, %v685
    %v693 = vrot.slane %v691, 1
    %694 = vrot.lane.b32.xlu0 %v693, 32
    %v695 = vpop.permute.xlu0 %694
    %v697 = vsel %vm194, %v695, 0
    %699 = vmatprep.subr.bf16.mxu0 0
    %700 = vmatpush1.bf16.msra.mxu0 %v190
    %701 = vmatprep.subr.bf16.mxu0 0
    %702 = vmatpush1.bf16.msra.mxu0 %v191
    %703 = vmatprep.subr.bf16.mxu0 0
    %704 = vmatpush1.bf16.msra.mxu0 0
    %705 = vmatprep.subr.bf16.mxu0 0
    %706 = vmatpush1.bf16.msra.mxu0 0
    %707 = vmatprep.subr.bf16.mxu0 0
    %708 = vmatpush1.bf16.msra.mxu0 0
    %709 = vmatprep.subr.bf16.mxu0 0
    %710 = vmatpush1.bf16.msra.mxu0 0
    %711 = vmatprep.subr.bf16.mxu0 0
    %712 = vmatpush1.bf16.msra.mxu0 0
    %713 = vmatprep.subr.bf16.mxu0 0
    %714 = vmatpush1.bf16.msra.mxu0 0
    %715 = vmatprep.subr.bf16.mxu0 0
    %716 = vmatpush1.bf16.msra.mxu0 0
    %717 = vmatprep.subr.bf16.mxu0 0
    %718 = vmatpush1.bf16.msra.mxu0 0
    %719 = vmatprep.subr.bf16.mxu0 0
    %720 = vmatpush1.bf16.msra.mxu0 0
    %721 = vmatprep.subr.bf16.mxu0 0
    %722 = vmatpush1.bf16.msra.mxu0 0
    %723 = vmatprep.subr.bf16.mxu0 0
    %724 = vmatpush1.bf16.msra.mxu0 0
    %725 = vmatprep.subr.bf16.mxu0 0
    %726 = vmatpush1.bf16.msra.mxu0 0
    %727 = vmatprep.subr.bf16.mxu0 0
    %728 = vmatpush1.bf16.msra.mxu0 0
    %729 = vmatprep.subr.bf16.mxu0 0
    %730 = vmatpush1.bf16.msra.mxu0 0
    %731 = vmatprep.mubr.bf16.mxu0 0
    %732 = vmatmul.mubr.bf16.gmra.mrb[0].mxu0 %v697
    %v733 = vpop.f32.mrb[0].mxu0
    %v734 = vadd.f32 0.0, %v733
    %v735 = vpop.f32.mrb[0].mxu0
    %v736 = vpop.f32.mrb[0].mxu0
    %v737 = vpop.f32.mrb[0].mxu0
    %738 = vdwg.mxu0
    %v740 = vrot.slane %v734, 4
    %v742 = vadd.f32 %v176, %v740
    %v743 = vxor.u32 %v742, 2147483648
    %v744 = vmul.f32 %v743, 1.442695
    %v745 = vpow.pop %v744
    %v746 = vadd.f32 %v745, 1.0
    %v747 = vrcp.pop %v746
    %v748 = vmul.f32 1.0, %v747
    %v749 = vtanh.pop %v742
    %v751 = vrot.slane %v679, 6
    %v753 = vmul.f32 %v748, %v751
    %755 = vrot.lane.b32.xlu0 %v749, 64
    %v756 = vpop.permute.xlu0 %755
    %v758 = vmul.f32 %v748, %v756
    %760 = vrot.lane.b32.xlu0 %v758, 32
    %v761 = vpop.permute.xlu0 %760
    %v763 = vadd.f32 %v753, %v761
    %v764 = vtanh.pop %v763
    %766 = vrot.lane.b32.xlu0 %v764, 64
    %v767 = vpop.permute.xlu0 %766
    %v769 = vmul.f32 %v748, %v767
    %771 = vrot.lane.b32.xlu0 %v769, 32
    %v772 = vpop.permute.xlu0 %771
    %774 = vst.msk [vmem:[#allocation2 + $0x8] sm:$0x30] %vm440, %v772
    %v775 = vpack.c.bf16 %v769, %v769
    %v777 = vrot.slane %v775, 2
    %778 = vrot.lane.b32.xlu0 %v777, 32
    %v779 = vpop.permute.xlu0 %778
    %v781 = vsel %vm194, %v779, 0
    %783 = vmatprep.subr.bf16.mxu0 0
    %784 = vmatpush1.bf16.msra.mxu0 %v190
    %785 = vmatprep.subr.bf16.mxu0 0
    %786 = vmatpush1.bf16.msra.mxu0 %v191
    %787 = vmatprep.subr.bf16.mxu0 0
    %788 = vmatpush1.bf16.msra.mxu0 0
    %789 = vmatprep.subr.bf16.mxu0 0
    %790 = vmatpush1.bf16.msra.mxu0 0
    %791 = vmatprep.subr.bf16.mxu0 0
    %792 = vmatpush1.bf16.msra.mxu0 0
    %793 = vmatprep.subr.bf16.mxu0 0
    %794 = vmatpush1.bf16.msra.mxu0 0
    %795 = vmatprep.subr.bf16.mxu0 0
    %796 = vmatpush1.bf16.msra.mxu0 0
    %797 = vmatprep.subr.bf16.mxu0 0
    %798 = vmatpush1.bf16.msra.mxu0 0
    %799 = vmatprep.subr.bf16.mxu0 0
    %800 = vmatpush1.bf16.msra.mxu0 0
    %801 = vmatprep.subr.bf16.mxu0 0
    %802 = vmatpush1.bf16.msra.mxu0 0
    %803 = vmatprep.subr.bf16.mxu0 0
    %804 = vmatpush1.bf16.msra.mxu0 0
    %805 = vmatprep.subr.bf16.mxu0 0
    %806 = vmatpush1.bf16.msra.mxu0 0
    %807 = vmatprep.subr.bf16.mxu0 0
    %808 = vmatpush1.bf16.msra.mxu0 0
    %809 = vmatprep.subr.bf16.mxu0 0
    %810 = vmatpush1.bf16.msra.mxu0 0
    %811 = vmatprep.subr.bf16.mxu0 0
    %812 = vmatpush1.bf16.msra.mxu0 0
    %813 = vmatprep.subr.bf16.mxu0 0
    %814 = vmatpush1.bf16.msra.mxu0 0
    %815 = vmatprep.mubr.bf16.mxu0 0
    %816 = vmatmul.mubr.bf16.gmra.mrb[0].mxu0 %v781
    %v817 = vpop.f32.mrb[0].mxu0
    %v818 = vadd.f32 0.0, %v817
    %v819 = vpop.f32.mrb[0].mxu0
    %v820 = vpop.f32.mrb[0].mxu0
    %v821 = vpop.f32.mrb[0].mxu0
    %822 = vdwg.mxu0
    %v824 = vrot.slane %v818, 2
    %v826 = vadd.f32 %v176, %v824
    %v827 = vxor.u32 %v826, 2147483648
    %v828 = vmul.f32 %v827, 1.442695
    %v829 = vpow.pop %v828
    %v830 = vadd.f32 %v829, 1.0
    %v831 = vrcp.pop %v830
    %v832 = vmul.f32 1.0, %v831
    %v833 = vtanh.pop %v826
    %v835 = vrot.slane %v763, 6
    %v837 = vmul.f32 %v832, %v835
    %839 = vrot.lane.b32.xlu0 %v833, 64
    %v840 = vpop.permute.xlu0 %839
    %v842 = vmul.f32 %v832, %v840
    %844 = vrot.lane.b32.xlu0 %v842, 32
    %v845 = vpop.permute.xlu0 %844
    %v847 = vadd.f32 %v837, %v845
    %v848 = vtanh.pop %v847
    %850 = vrot.lane.b32.xlu0 %v848, 64
    %v851 = vpop.permute.xlu0 %850
    %v853 = vmul.f32 %v832, %v851
    %855 = vrot.lane.b32.xlu0 %v853, 32
    %v856 = vpop.permute.xlu0 %855
    %858 = vst.msk [vmem:[#allocation2 + $0x8] sm:$0xc0] %vm525, %v856
    %859 = vst.msk [vmem:[#allocation12 - $0x6] sm:$0xc0] %vm525, %v856
    %861 = vrot.lane.b32.xlu0 %v847, 96
    %v862 = vpop.permute.xlu0 %861
    %864 = vst.msk [vmem:[#allocation13 - $0x6] sm:$0xc0] %vm525, %v862
    %v865 = vld [vmem:[#allocation2] sm:$0xff]
    %v866 = vld [vmem:[#allocation2 + $0x8] sm:$0xff]
    %v867 = vld [vmem:[#allocation9] sm:$0xf]
    %v868 = vld [vmem:[#allocation9 + $0x4] sm:$0xf]
    %v869 = vld [vmem:[#allocation9 + $0x8] sm:$0xf]
    %v870 = vld [vmem:[#allocation9 + $0xc] sm:$0xf]
    %v871 = vld [vmem:[#allocation11] sm:$0xf]
    %v872 = vld [vmem:[#allocation11 + $0x4] sm:$0xf]
    %v873 = vld [vmem:[#allocation11 + $0x8] sm:$0xf]
    %v874 = vld [vmem:[#allocation11 + $0xc] sm:$0xf]
    %v875 = vld [vmem:[%s8] sm:$0x1]
    %v876 = vpack.c.bf16 %v866, %v865
    %v878 = vlaneseq
    %v879 = vshrl.u32 %v878, 7
    %v880 = vsub.s32 0, %v879
    %v881 = vrot.slane %v875, %v880
    %v887 = vunpack.c.l.b16 %v867
    %v888 = vunpack.c.l.b16 %v868
    %v889 = vunpack.c.l.b16 %v869
    %v890 = vunpack.c.l.b16 %v870
    %v891 = vpack.c.b16 %v888, %v887
    %v892 = vpack.c.b16 %v890, %v889
    %v896 = vsel %vm194, %v876, 0
    %898 = vmatprep.subr.bf16.mxu0 0
    %899 = vmatpush1.bf16.msra.mxu0 %v891
    %900 = vmatprep.subr.bf16.mxu0 0
    %901 = vmatpush1.bf16.msra.mxu0 %v892
    %902 = vmatprep.subr.bf16.mxu0 0
    %903 = vmatpush1.bf16.msra.mxu0 0
    %904 = vmatprep.subr.bf16.mxu0 0
    %905 = vmatpush1.bf16.msra.mxu0 0
    %906 = vmatprep.subr.bf16.mxu0 0
    %907 = vmatpush1.bf16.msra.mxu0 0
    %908 = vmatprep.subr.bf16.mxu0 0
    %909 = vmatpush1.bf16.msra.mxu0 0
    %910 = vmatprep.subr.bf16.mxu0 0
    %911 = vmatpush1.bf16.msra.mxu0 0
    %912 = vmatprep.subr.bf16.mxu0 0
    %913 = vmatpush1.bf16.msra.mxu0 0
    %914 = vmatprep.subr.bf16.mxu0 0
    %915 = vmatpush1.bf16.msra.mxu0 0
    %916 = vmatprep.subr.bf16.mxu0 0
    %917 = vmatpush1.bf16.msra.mxu0 0
    %918 = vmatprep.subr.bf16.mxu0 0
    %919 = vmatpush1.bf16.msra.mxu0 0
    %920 = vmatprep.subr.bf16.mxu0 0
    %921 = vmatpush1.bf16.msra.mxu0 0
    %922 = vmatprep.subr.bf16.mxu0 0
    %923 = vmatpush1.bf16.msra.mxu0 0
    %924 = vmatprep.subr.bf16.mxu0 0
    %925 = vmatpush1.bf16.msra.mxu0 0
    %926 = vmatprep.subr.bf16.mxu0 0
    %927 = vmatpush1.bf16.msra.mxu0 0
    %928 = vmatprep.subr.bf16.mxu0 0
    %929 = vmatpush1.bf16.msra.mxu0 0
    %930 = vmatprep.mubr.bf16.mxu0 0
    %931 = vmatmul.mubr.bf16.gmra.mrb[0].mxu0 %v896
    %v932 = vpop.f32.mrb[0].mxu0
    %v933 = vadd.f32 %v881, %v932
    %v934 = vpop.f32.mrb[0].mxu0
    %v935 = vpop.f32.mrb[0].mxu0
    %v936 = vadd.f32 %v881, %v935
    %v937 = vpop.f32.mrb[0].mxu0
    %938 = vdwg.mxu0
    %s939 = scalar_lea.vmem [#allocation3], 2
    %v940 = vld [vmem:[%s939] sm:$0x3]
    %s941 = scalar_lea.vmem [#allocation6], 2
    %v942 = vld [vmem:[%s941] sm:$0x3]
    %v943 = vpack.c.bf16 %v940, %v940
    %v948 = vunpack.c.l.b16 %v871
    %v949 = vunpack.c.l.b16 %v872
    %v950 = vunpack.c.l.b16 %v873
    %v951 = vunpack.c.l.b16 %v874
    %v952 = vpack.c.b16 %v949, %v948
    %v953 = vpack.c.b16 %v951, %v950
    %v957 = vsel %vm194, %v943, 0
    %959 = vmatprep.subr.bf16.mxu0 0
    %960 = vmatpush1.bf16.msra.mxu0 %v952
    %961 = vmatprep.subr.bf16.mxu0 0
    %962 = vmatpush1.bf16.msra.mxu0 %v953
    %963 = vmatprep.subr.bf16.mxu0 0
    %964 = vmatpush1.bf16.msra.mxu0 0
    %965 = vmatprep.subr.bf16.mxu0 0
    %966 = vmatpush1.bf16.msra.mxu0 0
    %967 = vmatprep.subr.bf16.mxu0 0
    %968 = vmatpush1.bf16.msra.mxu0 0
    %969 = vmatprep.subr.bf16.mxu0 0
    %970 = vmatpush1.bf16.msra.mxu0 0
    %971 = vmatprep.subr.bf16.mxu0 0
    %972 = vmatpush1.bf16.msra.mxu0 0
    %973 = vmatprep.subr.bf16.mxu0 0
    %974 = vmatpush1.bf16.msra.mxu0 0
    %975 = vmatprep.subr.bf16.mxu0 0
    %976 = vmatpush1.bf16.msra.mxu0 0
    %977 = vmatprep.subr.bf16.mxu0 0
    %978 = vmatpush1.bf16.msra.mxu0 0
    %979 = vmatprep.subr.bf16.mxu0 0
    %980 = vmatpush1.bf16.msra.mxu0 0
    %981 = vmatprep.subr.bf16.mxu0 0
    %982 = vmatpush1.bf16.msra.mxu0 0
    %983 = vmatprep.subr.bf16.mxu0 0
    %984 = vmatpush1.bf16.msra.mxu0 0
    %985 = vmatprep.subr.bf16.mxu0 0
    %986 = vmatpush1.bf16.msra.mxu0 0
    %987 = vmatprep.subr.bf16.mxu0 0
    %988 = vmatpush1.bf16.msra.mxu0 0
    %989 = vmatprep.subr.bf16.mxu0 0
    %990 = vmatpush1.bf16.msra.mxu0 0
    %991 = vmatprep.mubr.bf16.mxu0 0
    %992 = vmatmul.mubr.bf16.gmra.mrb[0].mxu0 %v957
    %v993 = vpop.f32.mrb[0].mxu0
    %v994 = vadd.f32 0.0, %v993
    %v995 = vpop.f32.mrb[0].mxu0
    %v996 = vpop.f32.mrb[0].mxu0
    %v997 = vpop.f32.mrb[0].mxu0
    %998 = vdwg.mxu0
    %v999 = vadd.f32 %v933, %v994
    %v1000 = vxor.u32 %v999, 2147483648
    %v1001 = vmul.f32 %v1000, 1.442695
    %v1002 = vpow.pop %v1001
    %v1003 = vadd.f32 %v1002, 1.0
    %v1004 = vrcp.pop %v1003
    %v1005 = vmul.f32 1.0, %v1004
    %v1006 = vtanh.pop %v999
    %1008 = vrot.lane.b32.xlu0 %v942, 32
    %v1009 = vpop.permute.xlu0 %1008
    %v1011 = vmul.f32 %v1005, %v1009
    %1013 = vrot.lane.b32.xlu0 %v1006, 64
    %v1014 = vpop.permute.xlu0 %1013
    %v1016 = vmul.f32 %v1005, %v1014
    %1018 = vrot.lane.b32.xlu0 %v1016, 32
    %v1019 = vpop.permute.xlu0 %1018
    %v1021 = vadd.f32 %v1011, %v1019
    %v1022 = vtanh.pop %v1021
    %1024 = vrot.lane.b32.xlu0 %v1022, 64
    %v1025 = vpop.permute.xlu0 %1024
    %v1027 = vmul.f32 %v1005, %v1025
    %1029 = vrot.lane.b32.xlu0 %v1027, 32
    %v1030 = vpop.permute.xlu0 %1029
    %1032 = vst.msk [vmem:[#allocation2] sm:$0x3] %vm271, %v1030
    %v1033 = vpack.c.bf16 %v1027, %v1027
    %1035 = vrot.lane.b32.xlu0 %v1033, 32
    %v1036 = vpop.permute.xlu0 %1035
    %v1038 = vsel %vm194, %v1036, 0
    %1040 = vmatprep.subr.bf16.mxu0 0
    %1041 = vmatpush1.bf16.msra.mxu0 %v952
    %1042 = vmatprep.subr.bf16.mxu0 0
    %1043 = vmatpush1.bf16.msra.mxu0 %v953
    %1044 = vmatprep.subr.bf16.mxu0 0
    %1045 = vmatpush1.bf16.msra.mxu0 0
    %1046 = vmatprep.subr.bf16.mxu0 0
    %1047 = vmatpush1.bf16.msra.mxu0 0
    %1048 = vmatprep.subr.bf16.mxu0 0
    %1049 = vmatpush1.bf16.msra.mxu0 0
    %1050 = vmatprep.subr.bf16.mxu0 0
    %1051 = vmatpush1.bf16.msra.mxu0 0
    %1052 = vmatprep.subr.bf16.mxu0 0
    %1053 = vmatpush1.bf16.msra.mxu0 0
    %1054 = vmatprep.subr.bf16.mxu0 0
    %1055 = vmatpush1.bf16.msra.mxu0 0
    %1056 = vmatprep.subr.bf16.mxu0 0
    %1057 = vmatpush1.bf16.msra.mxu0 0
    %1058 = vmatprep.subr.bf16.mxu0 0
    %1059 = vmatpush1.bf16.msra.mxu0 0
    %1060 = vmatprep.subr.bf16.mxu0 0
    %1061 = vmatpush1.bf16.msra.mxu0 0
    %1062 = vmatprep.subr.bf16.mxu0 0
    %1063 = vmatpush1.bf16.msra.mxu0 0
    %1064 = vmatprep.subr.bf16.mxu0 0
    %1065 = vmatpush1.bf16.msra.mxu0 0
    %1066 = vmatprep.subr.bf16.mxu0 0
    %1067 = vmatpush1.bf16.msra.mxu0 0
    %1068 = vmatprep.subr.bf16.mxu0 0
    %1069 = vmatpush1.bf16.msra.mxu0 0
    %1070 = vmatprep.subr.bf16.mxu0 0
    %1071 = vmatpush1.bf16.msra.mxu0 0
    %1072 = vmatprep.mubr.bf16.mxu0 0
    %1073 = vmatmul.mubr.bf16.gmra.mrb[0].mxu0 %v1038
    %v1074 = vpop.f32.mrb[0].mxu0
    %v1075 = vadd.f32 0.0, %v1074
    %v1076 = vpop.f32.mrb[0].mxu0
    %v1077 = vpop.f32.mrb[0].mxu0
    %v1078 = vpop.f32.mrb[0].mxu0
    %1079 = vdwg.mxu0
    %v1081 = vrot.slane %v1075, 6
    %v1083 = vadd.f32 %v933, %v1081
    %v1084 = vxor.u32 %v1083, 2147483648
    %v1085 = vmul.f32 %v1084, 1.442695
    %v1086 = vpow.pop %v1085
    %v1087 = vadd.f32 %v1086, 1.0
    %v1088 = vrcp.pop %v1087
    %v1089 = vmul.f32 1.0, %v1088
    %v1090 = vtanh.pop %v1083
    %v1092 = vrot.slane %v1021, 6
    %v1094 = vmul.f32 %v1089, %v1092
    %1096 = vrot.lane.b32.xlu0 %v1090, 64
    %v1097 = vpop.permute.xlu0 %1096
    %v1099 = vmul.f32 %v1089, %v1097
    %1101 = vrot.lane.b32.xlu0 %v1099, 32
    %v1102 = vpop.permute.xlu0 %1101
    %v1104 = vadd.f32 %v1094, %v1102
    %v1105 = vtanh.pop %v1104
    %1107 = vrot.lane.b32.xlu0 %v1105, 64
    %v1108 = vpop.permute.xlu0 %1107
    %v1110 = vmul.f32 %v1089, %v1108
    %1112 = vrot.lane.b32.xlu0 %v1110, 32
    %v1113 = vpop.permute.xlu0 %1112
    %1115 = vst.msk [vmem:[#allocation2] sm:$0xc] %vm355, %v1113
    %v1116 = vpack.c.bf16 %v1110, %v1110
    %v1118 = vrot.slane %v1116, 1
    %1119 = vrot.lane.b32.xlu0 %v1118, 32
    %v1120 = vpop.permute.xlu0 %1119
    %v1122 = vsel %vm194, %v1120, 0
    %1124 = vmatprep.subr.bf16.mxu0 0
    %1125 = vmatpush1.bf16.msra.mxu0 %v952
    %1126 = vmatprep.subr.bf16.mxu0 0
    %1127 = vmatpush1.bf16.msra.mxu0 %v953
    %1128 = vmatprep.subr.bf16.mxu0 0
    %1129 = vmatpush1.bf16.msra.mxu0 0
    %1130 = vmatprep.subr.bf16.mxu0 0
    %1131 = vmatpush1.bf16.msra.mxu0 0
    %1132 = vmatprep.subr.bf16.mxu0 0
    %1133 = vmatpush1.bf16.msra.mxu0 0
    %1134 = vmatprep.subr.bf16.mxu0 0
    %1135 = vmatpush1.bf16.msra.mxu0 0
    %1136 = vmatprep.subr.bf16.mxu0 0
    %1137 = vmatpush1.bf16.msra.mxu0 0
    %1138 = vmatprep.subr.bf16.mxu0 0
    %1139 = vmatpush1.bf16.msra.mxu0 0
    %1140 = vmatprep.subr.bf16.mxu0 0
    %1141 = vmatpush1.bf16.msra.mxu0 0
    %1142 = vmatprep.subr.bf16.mxu0 0
    %1143 = vmatpush1.bf16.msra.mxu0 0
    %1144 = vmatprep.subr.bf16.mxu0 0
    %1145 = vmatpush1.bf16.msra.mxu0 0
    %1146 = vmatprep.subr.bf16.mxu0 0
    %1147 = vmatpush1.bf16.msra.mxu0 0
    %1148 = vmatprep.subr.bf16.mxu0 0
    %1149 = vmatpush1.bf16.msra.mxu0 0
    %1150 = vmatprep.subr.bf16.mxu0 0
    %1151 = vmatpush1.bf16.msra.mxu0 0
    %1152 = vmatprep.subr.bf16.mxu0 0
    %1153 = vmatpush1.bf16.msra.mxu0 0
    %1154 = vmatprep.subr.bf16.mxu0 0
    %1155 = vmatpush1.bf16.msra.mxu0 0
    %1156 = vmatprep.mubr.bf16.mxu0 0
    %1157 = vmatmul.mubr.bf16.gmra.mrb[0].mxu0 %v1122
    %v1158 = vpop.f32.mrb[0].mxu0
    %v1159 = vadd.f32 0.0, %v1158
    %v1160 = vpop.f32.mrb[0].mxu0
    %v1161 = vpop.f32.mrb[0].mxu0
    %v1162 = vpop.f32.mrb[0].mxu0
    %1163 = vdwg.mxu0
    %v1165 = vrot.slane %v1159, 4
    %v1167 = vadd.f32 %v933, %v1165
    %v1168 = vxor.u32 %v1167, 2147483648
    %v1169 = vmul.f32 %v1168, 1.442695
    %v1170 = vpow.pop %v1169
    %v1171 = vadd.f32 %v1170, 1.0
    %v1172 = vrcp.pop %v1171
    %v1173 = vmul.f32 1.0, %v1172
    %v1174 = vtanh.pop %v1167
    %v1176 = vrot.slane %v1104, 6
    %v1178 = vmul.f32 %v1173, %v1176
    %1180 = vrot.lane.b32.xlu0 %v1174, 64
    %v1181 = vpop.permute.xlu0 %1180
    %v1183 = vmul.f32 %v1173, %v1181
    %1185 = vrot.lane.b32.xlu0 %v1183, 32
    %v1186 = vpop.permute.xlu0 %1185
    %v1188 = vadd.f32 %v1178, %v1186
    %v1189 = vtanh.pop %v1188
    %1191 = vrot.lane.b32.xlu0 %v1189, 64
    %v1192 = vpop.permute.xlu0 %1191
    %v1194 = vmul.f32 %v1173, %v1192
    %1196 = vrot.lane.b32.xlu0 %v1194, 32
    %v1197 = vpop.permute.xlu0 %1196
    %1199 = vst.msk [vmem:[#allocation2] sm:$0x30] %vm440, %v1197
    %v1200 = vpack.c.bf16 %v1194, %v1194
    %v1202 = vrot.slane %v1200, 2
    %1203 = vrot.lane.b32.xlu0 %v1202, 32
    %v1204 = vpop.permute.xlu0 %1203
    %v1206 = vsel %vm194, %v1204, 0
    %1208 = vmatprep.subr.bf16.mxu0 0
    %1209 = vmatpush1.bf16.msra.mxu0 %v952
    %1210 = vmatprep.subr.bf16.mxu0 0
    %1211 = vmatpush1.bf16.msra.mxu0 %v953
    %1212 = vmatprep.subr.bf16.mxu0 0
    %1213 = vmatpush1.bf16.msra.mxu0 0
    %1214 = vmatprep.subr.bf16.mxu0 0
    %1215 = vmatpush1.bf16.msra.mxu0 0
    %1216 = vmatprep.subr.bf16.mxu0 0
    %1217 = vmatpush1.bf16.msra.mxu0 0
    %1218 = vmatprep.subr.bf16.mxu0 0
    %1219 = vmatpush1.bf16.msra.mxu0 0
    %1220 = vmatprep.subr.bf16.mxu0 0
    %1221 = vmatpush1.bf16.msra.mxu0 0
    %1222 = vmatprep.subr.bf16.mxu0 0
    %1223 = vmatpush1.bf16.msra.mxu0 0
    %1224 = vmatprep.subr.bf16.mxu0 0
    %1225 = vmatpush1.bf16.msra.mxu0 0
    %1226 = vmatprep.subr.bf16.mxu0 0
    %1227 = vmatpush1.bf16.msra.mxu0 0
    %1228 = vmatprep.subr.bf16.mxu0 0
    %1229 = vmatpush1.bf16.msra.mxu0 0
    %1230 = vmatprep.subr.bf16.mxu0 0
    %1231 = vmatpush1.bf16.msra.mxu0 0
    %1232 = vmatprep.subr.bf16.mxu0 0
    %1233 = vmatpush1.bf16.msra.mxu0 0
    %1234 = vmatprep.subr.bf16.mxu0 0
    %1235 = vmatpush1.bf16.msra.mxu0 0
    %1236 = vmatprep.subr.bf16.mxu0 0
    %1237 = vmatpush1.bf16.msra.mxu0 0
    %1238 = vmatprep.subr.bf16.mxu0 0
    %1239 = vmatpush1.bf16.msra.mxu0 0
    %1240 = vmatprep.mubr.bf16.mxu0 0
    %1241 = vmatmul.mubr.bf16.gmra.mrb[0].mxu0 %v1206
    %v1242 = vpop.f32.mrb[0].mxu0
    %v1243 = vadd.f32 0.0, %v1242
    %v1244 = vpop.f32.mrb[0].mxu0
    %v1245 = vpop.f32.mrb[0].mxu0
    %v1246 = vpop.f32.mrb[0].mxu0
    %1247 = vdwg.mxu0
    %v1249 = vrot.slane %v1243, 2
    %v1251 = vadd.f32 %v933, %v1249
    %v1252 = vxor.u32 %v1251, 2147483648
    %v1253 = vmul.f32 %v1252, 1.442695
    %v1254 = vpow.pop %v1253
    %v1255 = vadd.f32 %v1254, 1.0
    %v1256 = vrcp.pop %v1255
    %v1257 = vmul.f32 1.0, %v1256
    %v1258 = vtanh.pop %v1251
    %v1260 = vrot.slane %v1188, 6
    %v1262 = vmul.f32 %v1257, %v1260
    %1264 = vrot.lane.b32.xlu0 %v1258, 64
    %v1265 = vpop.permute.xlu0 %1264
    %v1267 = vmul.f32 %v1257, %v1265
    %1269 = vrot.lane.b32.xlu0 %v1267, 32
    %v1270 = vpop.permute.xlu0 %1269
    %v1272 = vadd.f32 %v1262, %v1270
    %v1273 = vtanh.pop %v1272
    %1275 = vrot.lane.b32.xlu0 %v1273, 64
    %v1276 = vpop.permute.xlu0 %1275
    %v1278 = vmul.f32 %v1257, %v1276
    %1280 = vrot.lane.b32.xlu0 %v1278, 32
    %v1281 = vpop.permute.xlu0 %1280
    %1283 = vst.msk [vmem:[#allocation2] sm:$0xc0] %vm525, %v1281
    %v1284 = vpack.c.bf16 %v1278, %v1278
    %v1286 = vrot.slane %v1284, 3
    %1287 = vrot.lane.b32.xlu0 %v1286, 32
    %v1288 = vpop.permute.xlu0 %1287
    %v1290 = vsel %vm194, %v1288, 0
    %1292 = vmatprep.subr.bf16.mxu0 0
    %1293 = vmatpush1.bf16.msra.mxu0 %v952
    %1294 = vmatprep.subr.bf16.mxu0 0
    %1295 = vmatpush1.bf16.msra.mxu0 %v953
    %1296 = vmatprep.subr.bf16.mxu0 0
    %1297 = vmatpush1.bf16.msra.mxu0 0
    %1298 = vmatprep.subr.bf16.mxu0 0
    %1299 = vmatpush1.bf16.msra.mxu0 0
    %1300 = vmatprep.subr.bf16.mxu0 0
    %1301 = vmatpush1.bf16.msra.mxu0 0
    %1302 = vmatprep.subr.bf16.mxu0 0
    %1303 = vmatpush1.bf16.msra.mxu0 0
    %1304 = vmatprep.subr.bf16.mxu0 0
    %1305 = vmatpush1.bf16.msra.mxu0 0
    %1306 = vmatprep.subr.bf16.mxu0 0
    %1307 = vmatpush1.bf16.msra.mxu0 0
    %1308 = vmatprep.subr.bf16.mxu0 0
    %1309 = vmatpush1.bf16.msra.mxu0 0
    %1310 = vmatprep.subr.bf16.mxu0 0
    %1311 = vmatpush1.bf16.msra.mxu0 0
    %1312 = vmatprep.subr.bf16.mxu0 0
    %1313 = vmatpush1.bf16.msra.mxu0 0
    %1314 = vmatprep.subr.bf16.mxu0 0
    %1315 = vmatpush1.bf16.msra.mxu0 0
    %1316 = vmatprep.subr.bf16.mxu0 0
    %1317 = vmatpush1.bf16.msra.mxu0 0
    %1318 = vmatprep.subr.bf16.mxu0 0
    %1319 = vmatpush1.bf16.msra.mxu0 0
    %1320 = vmatprep.subr.bf16.mxu0 0
    %1321 = vmatpush1.bf16.msra.mxu0 0
    %1322 = vmatprep.subr.bf16.mxu0 0
    %1323 = vmatpush1.bf16.msra.mxu0 0
    %1324 = vmatprep.mubr.bf16.mxu0 0
    %1325 = vmatmul.mubr.bf16.gmra.mrb[0].mxu0 %v1290
    %v1326 = vpop.f32.mrb[0].mxu0
    %v1327 = vadd.f32 0.0, %v1326
    %v1328 = vpop.f32.mrb[0].mxu0
    %v1329 = vpop.f32.mrb[0].mxu0
    %v1330 = vpop.f32.mrb[0].mxu0
    %1331 = vdwg.mxu0
    %v1332 = vadd.f32 %v936, %v1327
    %v1333 = vxor.u32 %v1332, 2147483648
    %v1334 = vmul.f32 %v1333, 1.442695
    %v1335 = vpow.pop %v1334
    %v1336 = vadd.f32 %v1335, 1.0
    %v1337 = vrcp.pop %v1336
    %v1338 = vmul.f32 1.0, %v1337
    %v1339 = vtanh.pop %v1332
    %v1341 = vrot.slane %v1272, 6
    %v1343 = vmul.f32 %v1338, %v1341
    %1345 = vrot.lane.b32.xlu0 %v1339, 64
    %v1346 = vpop.permute.xlu0 %1345
    %v1348 = vmul.f32 %v1338, %v1346
    %1350 = vrot.lane.b32.xlu0 %v1348, 32
    %v1351 = vpop.permute.xlu0 %1350
    %v1353 = vadd.f32 %v1343, %v1351
    %v1354 = vtanh.pop %v1353
    %1356 = vrot.lane.b32.xlu0 %v1354, 64
    %v1357 = vpop.permute.xlu0 %1356
    %v1359 = vmul.f32 %v1338, %v1357
    %1361 = vrot.lane.b32.xlu0 %v1359, 32
    %v1362 = vpop.permute.xlu0 %1361
    %1364 = vst.msk [vmem:[#allocation2 + $0x8] sm:$0x3] %vm271, %v1362
    %v1365 = vpack.c.bf16 %v1359, %v1359
    %1367 = vrot.lane.b32.xlu0 %v1365, 32
    %v1368 = vpop.permute.xlu0 %1367
    %v1370 = vsel %vm194, %v1368, 0
    %1372 = vmatprep.subr.bf16.mxu0 0
    %1373 = vmatpush1.bf16.msra.mxu0 %v952
    %1374 = vmatprep.subr.bf16.mxu0 0
    %1375 = vmatpush1.bf16.msra.mxu0 %v953
    %1376 = vmatprep.subr.bf16.mxu0 0
    %1377 = vmatpush1.bf16.msra.mxu0 0
    %1378 = vmatprep.subr.bf16.mxu0 0
    %1379 = vmatpush1.bf16.msra.mxu0 0
    %1380 = vmatprep.subr.bf16.mxu0 0
    %1381 = vmatpush1.bf16.msra.mxu0 0
    %1382 = vmatprep.subr.bf16.mxu0 0
    %1383 = vmatpush1.bf16.msra.mxu0 0
    %1384 = vmatprep.subr.bf16.mxu0 0
    %1385 = vmatpush1.bf16.msra.mxu0 0
    %1386 = vmatprep.subr.bf16.mxu0 0
    %1387 = vmatpush1.bf16.msra.mxu0 0
    %1388 = vmatprep.subr.bf16.mxu0 0
    %1389 = vmatpush1.bf16.msra.mxu0 0
    %1390 = vmatprep.subr.bf16.mxu0 0
    %1391 = vmatpush1.bf16.msra.mxu0 0
    %1392 = vmatprep.subr.bf16.mxu0 0
    %1393 = vmatpush1.bf16.msra.mxu0 0
    %1394 = vmatprep.subr.bf16.mxu0 0
    %1395 = vmatpush1.bf16.msra.mxu0 0
    %1396 = vmatprep.subr.bf16.mxu0 0
    %1397 = vmatpush1.bf16.msra.mxu0 0
    %1398 = vmatprep.subr.bf16.mxu0 0
    %1399 = vmatpush1.bf16.msra.mxu0 0
    %1400 = vmatprep.subr.bf16.mxu0 0
    %1401 = vmatpush1.bf16.msra.mxu0 0
    %1402 = vmatprep.subr.bf16.mxu0 0
    %1403 = vmatpush1.bf16.msra.mxu0 0
    %1404 = vmatprep.mubr.bf16.mxu0 0
    %1405 = vmatmul.mubr.bf16.gmra.mrb[0].mxu0 %v1370
    %v1406 = vpop.f32.mrb[0].mxu0
    %v1407 = vadd.f32 0.0, %v1406
    %v1408 = vpop.f32.mrb[0].mxu0
    %v1409 = vpop.f32.mrb[0].mxu0
    %v1410 = vpop.f32.mrb[0].mxu0
    %1411 = vdwg.mxu0
    %v1413 = vrot.slane %v1407, 6
    %v1415 = vadd.f32 %v936, %v1413
    %v1416 = vxor.u32 %v1415, 2147483648
    %v1417 = vmul.f32 %v1416, 1.442695
    %v1418 = vpow.pop %v1417
    %v1419 = vadd.f32 %v1418, 1.0
    %v1420 = vrcp.pop %v1419
    %v1421 = vmul.f32 1.0, %v1420
    %v1422 = vtanh.pop %v1415
    %v1424 = vrot.slane %v1353, 6
    %v1426 = vmul.f32 %v1421, %v1424
    %1428 = vrot.lane.b32.xlu0 %v1422, 64
    %v1429 = vpop.permute.xlu0 %1428
    %v1431 = vmul.f32 %v1421, %v1429
    %1433 = vrot.lane.b32.xlu0 %v1431, 32
    %v1434 = vpop.permute.xlu0 %1433
    %v1436 = vadd.f32 %v1426, %v1434
    %v1437 = vtanh.pop %v1436
    %1439 = vrot.lane.b32.xlu0 %v1437, 64
    %v1440 = vpop.permute.xlu0 %1439
    %v1442 = vmul.f32 %v1421, %v1440
    %1444 = vrot.lane.b32.xlu0 %v1442, 32
    %v1445 = vpop.permute.xlu0 %1444
    %1447 = vst.msk [vmem:[#allocation2 + $0x8] sm:$0xc] %vm355, %v1445
    %v1448 = vpack.c.bf16 %v1442, %v1442
    %v1450 = vrot.slane %v1448, 1
    %1451 = vrot.lane.b32.xlu0 %v1450, 32
    %v1452 = vpop.permute.xlu0 %1451
    %v1454 = vsel %vm194, %v1452, 0
    %1456 = vmatprep.subr.bf16.mxu0 0
    %1457 = vmatpush1.bf16.msra.mxu0 %v952
    %1458 = vmatprep.subr.bf16.mxu0 0
    %1459 = vmatpush1.bf16.msra.mxu0 %v953
    %1460 = vmatprep.subr.bf16.mxu0 0
    %1461 = vmatpush1.bf16.msra.mxu0 0
    %1462 = vmatprep.subr.bf16.mxu0 0
    %1463 = vmatpush1.bf16.msra.mxu0 0
    %1464 = vmatprep.subr.bf16.mxu0 0
    %1465 = vmatpush1.bf16.msra.mxu0 0
    %1466 = vmatprep.subr.bf16.mxu0 0
    %1467 = vmatpush1.bf16.msra.mxu0 0
    %1468 = vmatprep.subr.bf16.mxu0 0
    %1469 = vmatpush1.bf16.msra.mxu0 0
    %1470 = vmatprep.subr.bf16.mxu0 0
    %1471 = vmatpush1.bf16.msra.mxu0 0
    %1472 = vmatprep.subr.bf16.mxu0 0
    %1473 = vmatpush1.bf16.msra.mxu0 0
    %1474 = vmatprep.subr.bf16.mxu0 0
    %1475 = vmatpush1.bf16.msra.mxu0 0
    %1476 = vmatprep.subr.bf16.mxu0 0
    %1477 = vmatpush1.bf16.msra.mxu0 0
    %1478 = vmatprep.subr.bf16.mxu0 0
    %1479 = vmatpush1.bf16.msra.mxu0 0
    %1480 = vmatprep.subr.bf16.mxu0 0
    %1481 = vmatpush1.bf16.msra.mxu0 0
    %1482 = vmatprep.subr.bf16.mxu0 0
    %1483 = vmatpush1.bf16.msra.mxu0 0
    %1484 = vmatprep.subr.bf16.mxu0 0
    %1485 = vmatpush1.bf16.msra.mxu0 0
    %1486 = vmatprep.subr.bf16.mxu0 0
    %1487 = vmatpush1.bf16.msra.mxu0 0
    %1488 = vmatprep.mubr.bf16.mxu0 0
    %1489 = vmatmul.mubr.bf16.gmra.mrb[0].mxu0 %v1454
    %v1490 = vpop.f32.mrb[0].mxu0
    %v1491 = vadd.f32 0.0, %v1490
    %v1492 = vpop.f32.mrb[0].mxu0
    %v1493 = vpop.f32.mrb[0].mxu0
    %v1494 = vpop.f32.mrb[0].mxu0
    %1495 = vdwg.mxu0
    %v1497 = vrot.slane %v1491, 4
    %v1499 = vadd.f32 %v936, %v1497
    %v1500 = vxor.u32 %v1499, 2147483648
    %v1501 = vmul.f32 %v1500, 1.442695
    %v1502 = vpow.pop %v1501
    %v1503 = vadd.f32 %v1502, 1.0
    %v1504 = vrcp.pop %v1503
    %v1505 = vmul.f32 1.0, %v1504
    %v1506 = vtanh.pop %v1499
    %v1508 = vrot.slane %v1436, 6
    %v1510 = vmul.f32 %v1505, %v1508
    %1512 = vrot.lane.b32.xlu0 %v1506, 64
    %v1513 = vpop.permute.xlu0 %1512
    %v1515 = vmul.f32 %v1505, %v1513
    %1517 = vrot.lane.b32.xlu0 %v1515, 32
    %v1518 = vpop.permute.xlu0 %1517
    %v1520 = vadd.f32 %v1510, %v1518
    %v1521 = vtanh.pop %v1520
    %1523 = vrot.lane.b32.xlu0 %v1521, 64
    %v1524 = vpop.permute.xlu0 %1523
    %v1526 = vmul.f32 %v1505, %v1524
    %1528 = vrot.lane.b32.xlu0 %v1526, 32
    %v1529 = vpop.permute.xlu0 %1528
    %1531 = vst.msk [vmem:[#allocation2 + $0x8] sm:$0x30] %vm440, %v1529
    %v1532 = vpack.c.bf16 %v1526, %v1526
    %v1534 = vrot.slane %v1532, 2
    %1535 = vrot.lane.b32.xlu0 %v1534, 32
    %v1536 = vpop.permute.xlu0 %1535
    %v1538 = vsel %vm194, %v1536, 0
    %1540 = vmatprep.subr.bf16.mxu0 0
    %1541 = vmatpush1.bf16.msra.mxu0 %v952
    %1542 = vmatprep.subr.bf16.mxu0 0
    %1543 = vmatpush1.bf16.msra.mxu0 %v953
    %1544 = vmatprep.subr.bf16.mxu0 0
    %1545 = vmatpush1.bf16.msra.mxu0 0
    %1546 = vmatprep.subr.bf16.mxu0 0
    %1547 = vmatpush1.bf16.msra.mxu0 0
    %1548 = vmatprep.subr.bf16.mxu0 0
    %1549 = vmatpush1.bf16.msra.mxu0 0
    %1550 = vmatprep.subr.bf16.mxu0 0
    %1551 = vmatpush1.bf16.msra.mxu0 0
    %1552 = vmatprep.subr.bf16.mxu0 0
    %1553 = vmatpush1.bf16.msra.mxu0 0
    %1554 = vmatprep.subr.bf16.mxu0 0
    %1555 = vmatpush1.bf16.msra.mxu0 0
    %1556 = vmatprep.subr.bf16.mxu0 0
    %1557 = vmatpush1.bf16.msra.mxu0 0
    %1558 = vmatprep.subr.bf16.mxu0 0
    %1559 = vmatpush1.bf16.msra.mxu0 0
    %1560 = vmatprep.subr.bf16.mxu0 0
    %1561 = vmatpush1.bf16.msra.mxu0 0
    %1562 = vmatprep.subr.bf16.mxu0 0
    %1563 = vmatpush1.bf16.msra.mxu0 0
    %1564 = vmatprep.subr.bf16.mxu0 0
    %1565 = vmatpush1.bf16.msra.mxu0 0
    %1566 = vmatprep.subr.bf16.mxu0 0
    %1567 = vmatpush1.bf16.msra.mxu0 0
    %1568 = vmatprep.subr.bf16.mxu0 0
    %1569 = vmatpush1.bf16.msra.mxu0 0
    %1570 = vmatprep.subr.bf16.mxu0 0
    %1571 = vmatpush1.bf16.msra.mxu0 0
    %1572 = vmatprep.mubr.bf16.mxu0 0
    %1573 = vmatmul.mubr.bf16.gmra.mrb[0].mxu0 %v1538
    %v1574 = vpop.f32.mrb[0].mxu0
    %v1575 = vadd.f32 0.0, %v1574
    %v1576 = vpop.f32.mrb[0].mxu0
    %v1577 = vpop.f32.mrb[0].mxu0
    %v1578 = vpop.f32.mrb[0].mxu0
    %1579 = vdwg.mxu0
    %v1581 = vrot.slane %v1575, 2
    %v1583 = vadd.f32 %v936, %v1581
    %v1584 = vxor.u32 %v1583, 2147483648
    %v1585 = vmul.f32 %v1584, 1.442695
    %v1586 = vpow.pop %v1585
    %v1587 = vadd.f32 %v1586, 1.0
    %v1588 = vrcp.pop %v1587
    %v1589 = vmul.f32 1.0, %v1588
    %v1590 = vtanh.pop %v1583
    %v1592 = vrot.slane %v1520, 6
    %v1594 = vmul.f32 %v1589, %v1592
    %1596 = vrot.lane.b32.xlu0 %v1590, 64
    %v1597 = vpop.permute.xlu0 %1596
    %v1599 = vmul.f32 %v1589, %v1597
    %1601 = vrot.lane.b32.xlu0 %v1599, 32
    %v1602 = vpop.permute.xlu0 %1601
    %v1604 = vadd.f32 %v1594, %v1602
    %v1605 = vtanh.pop %v1604
    %1607 = vrot.lane.b32.xlu0 %v1605, 64
    %v1608 = vpop.permute.xlu0 %1607
    %v1610 = vmul.f32 %v1589, %v1608
    %1612 = vrot.lane.b32.xlu0 %v1610, 32
    %v1613 = vpop.permute.xlu0 %1612
    %1615 = vst.msk [vmem:[#allocation2 + $0x8] sm:$0xc0] %vm525, %v1613
    %s1616 = scalar_lea.vmem [#allocation12], 2
    %1617 = vst.msk [vmem:[%s1616 - $0x6] sm:$0xc0] %vm525, %v1613
    %1619 = vrot.lane.b32.xlu0 %v1604, 96
    %v1620 = vpop.permute.xlu0 %1619
    %s1622 = scalar_lea.vmem [#allocation13], 2
    %1623 = vst.msk [vmem:[%s1622 - $0x6] sm:$0xc0] %vm525, %v1620
    %v1624 = vld [vmem:[#allocation2] sm:$0xff]
    %v1625 = vld [vmem:[#allocation2 + $0x8] sm:$0xff]
    %v1626 = vpack.c.bf16 %v1625, %v1624
    %v1627 = vld [vmem:[%s9] sm:$0xf]
    %v1628 = vld [vmem:[%s9 + $0x4] sm:$0xf]
    %v1629 = vld [vmem:[%s9 + $0x8] sm:$0xf]
    %v1630 = vld [vmem:[%s9 + $0xc] sm:$0xf]
    %v1631 = vld [vmem:[%s10] sm:$0x1]
    %v1633 = vlaneseq
    %v1634 = vshrl.u32 %v1633, 7
    %v1635 = vsub.s32 0, %v1634
    %v1636 = vrot.slane %v1631, %v1635
    %v1642 = vunpack.c.l.b16 %v1627
    %v1643 = vunpack.c.l.b16 %v1628
    %v1644 = vunpack.c.l.b16 %v1629
    %v1645 = vunpack.c.l.b16 %v1630
    %v1646 = vpack.c.b16 %v1643, %v1642
    %v1647 = vpack.c.b16 %v1645, %v1644
    %v1651 = vsel %vm194, %v1626, 0
    %1653 = vmatprep.subr.bf16.mxu0 0
    %1654 = vmatpush1.bf16.msra.mxu0 %v1646
    %1655 = vmatprep.subr.bf16.mxu0 0
    %1656 = vmatpush1.bf16.msra.mxu0 %v1647
    %1657 = vmatprep.subr.bf16.mxu0 0
    %1658 = vmatpush1.bf16.msra.mxu0 0
    %1659 = vmatprep.subr.bf16.mxu0 0
    %1660 = vmatpush1.bf16.msra.mxu0 0
    %1661 = vmatprep.subr.bf16.mxu0 0
    %1662 = vmatpush1.bf16.msra.mxu0 0
    %1663 = vmatprep.subr.bf16.mxu0 0
    %1664 = vmatpush1.bf16.msra.mxu0 0
    %1665 = vmatprep.subr.bf16.mxu0 0
    %1666 = vmatpush1.bf16.msra.mxu0 0
    %1667 = vmatprep.subr.bf16.mxu0 0
    %1668 = vmatpush1.bf16.msra.mxu0 0
    %1669 = vmatprep.subr.bf16.mxu0 0
    %1670 = vmatpush1.bf16.msra.mxu0 0
    %1671 = vmatprep.subr.bf16.mxu0 0
    %1672 = vmatpush1.bf16.msra.mxu0 0
    %1673 = vmatprep.subr.bf16.mxu0 0
    %1674 = vmatpush1.bf16.msra.mxu0 0
    %1675 = vmatprep.subr.bf16.mxu0 0
    %1676 = vmatpush1.bf16.msra.mxu0 0
    %1677 = vmatprep.subr.bf16.mxu0 0
    %1678 = vmatpush1.bf16.msra.mxu0 0
    %1679 = vmatprep.subr.bf16.mxu0 0
    %1680 = vmatpush1.bf16.msra.mxu0 0
    %1681 = vmatprep.subr.bf16.mxu0 0
    %1682 = vmatpush1.bf16.msra.mxu0 0
    %1683 = vmatprep.subr.bf16.mxu0 0
    %1684 = vmatpush1.bf16.msra.mxu0 0
    %1685 = vmatprep.mubr.bf16.mxu0 0
    %1686 = vmatmul.mubr.bf16.gmra.mrb[0].mxu0 %v1651
    %v1687 = vpop.f32.mrb[0].mxu0
    %v1688 = vadd.f32 %v1636, %v1687
    %v1689 = vpop.f32.mrb[0].mxu0
    %v1690 = vpop.f32.mrb[0].mxu0
    %v1691 = vadd.f32 %v1636, %v1690
    %v1692 = vpop.f32.mrb[0].mxu0
    %1693 = vdwg.mxu0
    %vm1694 = vcmask 64512
    %1695 = vst.msk [vmem:[%s11] sm:$0xff] %vm1694, %v1688
    %1696 = vst.msk [vmem:[%s11 + $0x8] sm:$0xff] %vm1694, %v1691
    // Predicated region
    $region66: #{tpu_custom_call.1} parent=1 // pred_check
      _
    $region67: #{tpu_custom_call.1} parent=1 // pred_check_branch
      %1698 = sbr.rel (0) target = $region69
    $region68: #{tpu_custom_call.1} parent=1 // pred_region
      _
    $region69: #{tpu_custom_call.1} parent=1 // pred_fallthru
      _
    // Predicated region
    $region70: #{tpu_custom_call.1} parent=1 // pred_check
      _
    $region71: #{tpu_custom_call.1} parent=1 // pred_check_branch
      %1700 = sbr.rel (0) target = $region73
    $region72: #{tpu_custom_call.1} parent=1 // pred_region
      %s1702 = ssub.s32 64, 64
      %1703 = vsyncadd [#allocation5], %s1702
      %s1704 = sshll.u32 [#allocation12], 4
      %s1705 = int_to_ptr.vmem [resolvable:$true] %s1704
      %1710 = dma.vmem_to_hbm [thread:$0]  %s1705, 64, %s12, [#allocation5], 32, 32, 2
    $region73: #{tpu_custom_call.1} parent=1 // pred_fallthru
      _
    // Predicated region
    $region74: #{tpu_custom_call.1} parent=1 // pred_check
      _
    $region75: #{tpu_custom_call.1} parent=1 // pred_check_branch
      %1712 = sbr.rel (0) target = $region77
    $region76: #{tpu_custom_call.1} parent=1 // pred_region
      %s1714 = ssub.s32 64, 64
      %1715 = vsyncadd [#allocation14], %s1714
      %s1716 = sshll.u32 [#allocation13], 4
      %s1717 = int_to_ptr.vmem [resolvable:$true] %s1716
      %1722 = dma.vmem_to_hbm [thread:$0]  %s1717, 64, %s13, [#allocation14], 32, 32, 2
    $region77: #{tpu_custom_call.1} parent=1 // pred_fallthru
      _
    // Predicated region
    $region78: #{tpu_custom_call.1} parent=1 // pred_check
      _
    $region79: #{tpu_custom_call.1} parent=1 // pred_check_branch
      %1724 = sbr.rel (0) target = $region81
    $region80: #{tpu_custom_call.1} parent=1 // pred_region
      _
    $region81: #{tpu_custom_call.1} parent=1 // pred_fallthru
      _
    // Predicated region
    $region82: #{tpu_custom_call.1} parent=1 // pred_check
      _
    $region83: #{tpu_custom_call.1} parent=1 // pred_check_branch
      %1726 = sbr.rel (0) target = $region85
    $region84: #{tpu_custom_call.1} parent=1 // pred_region
      %1727 = dma.done [#allocation5], 64
    $region85: #{tpu_custom_call.1} parent=1 // pred_fallthru
      _
    // Predicated region
    $region86: #{tpu_custom_call.1} parent=1 // pred_check
      _
    $region87: #{tpu_custom_call.1} parent=1 // pred_check_branch
      %1729 = sbr.rel (0) target = $region89
    $region88: #{tpu_custom_call.1} parent=1 // pred_region
      %1730 = dma.done [#allocation14], 64
    $region89: #{tpu_custom_call.1} parent=1 // pred_fallthru
      _
    %1731 = vsyncpa [#allocation4], 1
    %1732 = vsyncpa [#allocation7], 1
    %1733 = vsyncpa [#allocation10], 1
    %1734 = vsyncpa [#allocation5], 1
    %1735 = vsyncpa [#allocation14], 1

</llo_original>
